<compile_context>
chip_gen: v7x
topology: tpu7x:2x2x1
jax: 0.10.0
libtpu: 0.0.40
codegen_flags: <defaults>
</compile_context>

<pallas_src>
import functools
import numpy as np
import jax
import jax.numpy as jnp
from jax import lax
from jax.experimental import pallas as pl
from jax.experimental.pallas import tpu as pltpu

C1, C2 = 4, 2          # conv output channels
K1, K2 = 6, 3          # conv kernel sizes
PAD = 3                # padding of both convs
PACK_W = 128           # lane width of the packed parameter buffer


def _dims(n_in):
    h1 = n_in + 2 * PAD - (K1 - 1) - 1 + 1   # conv1 spatial out
    hp1 = h1 // 2                            # after 2x2 pool
    h2 = hp1 + 2 * PAD - (K2 - 1) - 1 + 1    # conv2 spatial out
    hp2 = h2 // 2                            # after 2x2 pool
    return h1, hp1, h2, hp2


def _layout(n_in, n_out):
    """Shapes and 8-row-aligned offsets of every entry in the packed params."""
    h1, hp1, h2, hp2 = _dims(n_in)
    k1w = K1 * n_in          # conv1 contraction width (96)
    cw1 = C1 * h1            # conv1 output lanes (68)
    pw1 = C1 * hp1           # pooled conv1 lanes (32)
    k2w = K2 * pw1           # conv2 contraction width (96)
    cw2 = C2 * h2            # conv2 output lanes (24)
    pw2 = C2 * hp2           # pooled conv2 lanes (12)
    fw = hp2 * pw2           # flattened l1 input width (72)
    l1o = fw // 2            # l1 output (36)
    order = [
        ("rep1", (n_in, k1w)), ("m1k", (K1, k1w)), ("b1w", (k1w, cw1)),
        ("sw1", (2 * cw1, k2w)), ("bias1", (1, k2w)), ("m2k", (K2, k2w)),
        ("b2w", (k2w, cw2)), ("sw2", (2 * cw2, fw)), ("bias2", (1, fw)),
        ("fmask", (hp2, fw)), ("wl1", (fw, l1o)), ("bl1", (1, l1o)),
        ("wl2", (l1o, 30)), ("bl2", (1, 30)), ("wl3", (30, n_out)),
        ("bl3", (1, n_out)),
    ]
    shapes, offs, r = {}, {}, 0
    for name, shp in order:
        assert shp[1] <= PACK_W
        shapes[name] = shp
        offs[name] = r
        r += (shp[0] + 7) // 8 * 8
    return shapes, offs, r


# ----------------------------- fused forward -------------------------------

def net5_forward(x, pack, *, n_out):
    n = x.shape[0]
    n_in = x.shape[2]
    h1, hp1, h2, hp2 = _dims(n_in)
    shapes, offs, _ = _layout(n_in, n_out)
    k1w = K1 * n_in
    cw1 = C1 * h1
    pw1 = C1 * hp1
    k2w = K2 * pw1
    cw2 = C2 * h2
    pw2 = C2 * hp2
    fw = hp2 * pw2
    hp1p = n_in + 2 * PAD     # padded rows per sample feeding conv1
    hp2p = hp1 + 2 * PAD      # padded rows per sample feeding conv2
    f32 = jnp.float32

    def kernel(x_ref, pk_ref, o_ref,
               xrep_ref, lhs1_ref, rp1_ref, y1rep_ref, lhs2_ref, rp2_ref,
               flat_ref):
        def P(name):                                   # packed-parameter slice
            r0 = offs[name]
            rr, cc = shapes[name]
            return pk_ref[r0:r0 + rr, 0:cc]

        zpad1 = jnp.zeros((PAD, k1w), f32)
        zpad2 = jnp.zeros((PAD, k2w), f32)

        # ---- conv1 input: zero pad rows + replicate lanes K1x (1 matmul) ----
        xr = jnp.dot(x_ref[...], P("rep1"), preferred_element_type=f32)
        for b in range(n):
            base = b * hp1p
            xrep_ref[base:base + PAD, :] = zpad1
            xrep_ref[base + PAD:base + PAD + n_in, :] = xr[b * n_in:(b + 1) * n_in, :]
            xrep_ref[base + PAD + n_in:base + hp1p, :] = zpad1

        # ---- conv1 LHS: K1 shifted row-windows, one per 16-lane group (VPU) --
        m1 = [pk_ref[offs["m1k"] + k:offs["m1k"] + k + 1, 0:k1w] for k in range(K1)]
        for b in range(n):
            acc = None
            for ki in range(K1):
                t = m1[ki] * xrep_ref[b * hp1p + ki:b * hp1p + ki + h1, :]
                acc = t if acc is None else acc + t
            lhs1_ref[b * h1:(b + 1) * h1, :] = acc

        # ---- conv1: ONE fused matmul, contraction K1*n_in ---------------------
        c1 = jnp.dot(lhs1_ref[...], P("b1w"), preferred_element_type=f32)

        # ---- 2x2 pool: rows via pairwise max (VPU), cols via 0/1 matmuls ------
        for b in range(n):
            for r in range(hp1):
                s = b * h1 + 2 * r
                rp1_ref[b * hp1 + r:b * hp1 + r + 1, :] = jnp.maximum(
                    c1[s:s + 1, :], c1[s + 1:s + 2, :])
        rp1 = rp1_ref[...]
        sw1a = pk_ref[offs["sw1"]:offs["sw1"] + cw1, 0:k2w]
        sw1b = pk_ref[offs["sw1"] + cw1:offs["sw1"] + 2 * cw1, 0:k2w]
        p1 = jnp.maximum(jnp.dot(rp1, sw1a, preferred_element_type=f32),
                         jnp.dot(rp1, sw1b, preferred_element_type=f32))
        y1 = jnp.maximum(p1 + P("bias1"), 0.0)   # (n*hp1, k2w), K2x replicated

        # ---- conv2 input: zero pad rows (lane replication came from sw1) ------
        for b in range(n):
            base = b * hp2p
            y1rep_ref[base:base + PAD, :] = zpad2
            y1rep_ref[base + PAD:base + PAD + hp1, :] = y1[b * hp1:(b + 1) * hp1, :]
            y1rep_ref[base + PAD + hp1:base + hp2p, :] = zpad2

        # ---- conv2 LHS + ONE fused matmul, contraction K2*C1*hp1 --------------
        m2 = [pk_ref[offs["m2k"] + k:offs["m2k"] + k + 1, 0:k2w] for k in range(K2)]
        for b in range(n):
            acc = None
            for ki in range(K2):
                t = m2[ki] * y1rep_ref[b * hp2p + ki:b * hp2p + ki + h2, :]
                acc = t if acc is None else acc + t
            lhs2_ref[b * h2:(b + 1) * h2, :] = acc
        c2 = jnp.dot(lhs2_ref[...], P("b2w"), preferred_element_type=f32)

        # ---- 2x2 pool #2 (sw2 also replicates hp2x for the flatten) -----------
        for b in range(n):
            for r in range(hp2):
                s = b * h2 + 2 * r
                rp2_ref[b * hp2 + r:b * hp2 + r + 1, :] = jnp.maximum(
                    c2[s:s + 1, :], c2[s + 1:s + 2, :])
        rp2 = rp2_ref[...]
        sw2a = pk_ref[offs["sw2"]:offs["sw2"] + cw2, 0:fw]
        sw2b = pk_ref[offs["sw2"] + cw2:offs["sw2"] + 2 * cw2, 0:fw]
        p2 = jnp.maximum(jnp.dot(rp2, sw2a, preferred_element_type=f32),
                         jnp.dot(rp2, sw2b, preferred_element_type=f32))
        y2 = jnp.maximum(p2 + P("bias2"), 0.0)   # (n*hp2, fw), hp2x replicated

        # ---- flatten (torch C,H,W order folded into wl1): per-row lane select --
        fm = [pk_ref[offs["fmask"] + r:offs["fmask"] + r + 1, 0:fw] for r in range(hp2)]
        for b in range(n):
            acc = None
            for r in range(hp2):
                t = fm[r] * y2[b * hp2 + r:b * hp2 + r + 1, :]
                acc = t if acc is None else acc + t
            flat_ref[b:b + 1, :] = acc

        # ---- MLP: l1 -> ReLU -> l2 -> ReLU -> l3 (batch-stacked rows) ---------
        hid = jnp.maximum(
            jnp.dot(flat_ref[...], P("wl1"), preferred_element_type=f32) + P("bl1"), 0.0)
        hid = jnp.maximum(
            jnp.dot(hid, P("wl2"), preferred_element_type=f32) + P("bl2"), 0.0)
        o_ref[...] = jnp.dot(hid, P("wl3"), preferred_element_type=f32) + P("bl3")

    x2d = x.reshape(n * n_in, n_in)       # drop channel dim, stack batch in rows
    vs = pl.BlockSpec(memory_space=pltpu.MemorySpace.VMEM)
    return pl.pallas_call(
        kernel,
        out_shape=jax.ShapeDtypeStruct((n, n_out), f32),
        in_specs=[vs, vs],
        out_specs=vs,
        scratch_shapes=[
            pltpu.VMEM((n * hp1p, k1w), f32),   # xrep : padded, lane-replicated input
            pltpu.VMEM((n * h1, k1w), f32),     # lhs1 : conv1 fused-tap LHS
            pltpu.VMEM((n * hp1, cw1), f32),    # rp1  : row-pooled conv1
            pltpu.VMEM((n * hp2p, k2w), f32),   # y1rep: padded pooled conv1
            pltpu.VMEM((n * h2, k2w), f32),     # lhs2 : conv2 fused-tap LHS
            pltpu.VMEM((n * hp2, cw2), f32),    # rp2  : row-pooled conv2
            pltpu.VMEM((n, fw), f32),           # flat : l1 input
        ],
    )(x2d, pack)


# ------------------ deterministic parameters + preprocessing ----------------

def _build_pack(p, n_in, n_out):
    h1, hp1, h2, hp2 = _dims(n_in)
    k1w = K1 * n_in
    cw1 = C1 * h1
    pw1 = C1 * hp1
    k2w = K2 * pw1
    cw2 = C2 * h2
    pw2 = C2 * hp2
    fw = hp2 * pw2
    l1o = fw // 2
    shapes, offs, total = _layout(n_in, n_out)

    w1 = np.asarray(p["w1"], np.float32)
    b1 = np.asarray(p["b1"], np.float32)
    w2 = np.asarray(p["w2"], np.float32)
    b2 = np.asarray(p["b2"], np.float32)
    wl1 = np.asarray(p["wl1"], np.float32)

    ent = {}

    rep1 = np.zeros((n_in, k1w), np.float32)            # replicate input row K1x
    for ki in range(K1):
        for c in range(n_in):
            rep1[c, ki * n_in + c] = 1.0
    ent["rep1"] = rep1

    m1k = np.zeros((K1, k1w), np.float32)                # per-tap lane-group masks
    for ki in range(K1):
        m1k[ki, ki * n_in:(ki + 1) * n_in] = 1.0
    ent["m1k"] = m1k

    b1w = np.zeros((k1w, cw1), np.float32)               # fused conv1 weight
    for ki in range(K1):
        for c in range(n_in):
            for co in range(C1):
                for w in range(h1):
                    kj = c + PAD - w
                    if 0 <= kj < K1:
                        b1w[ki * n_in + c, co * h1 + w] = w1[co, 0, ki, kj]
    ent["b1w"] = b1w

    sw1 = np.zeros((2, cw1, k2w), np.float32)            # col pool + K2x replicate
    for j in range(2):
        for co in range(C1):
            for q in range(hp1):
                for ki in range(K2):
                    sw1[j, co * h1 + 2 * q + j, ki * pw1 + co * hp1 + q] = 1.0
    ent["sw1"] = sw1.reshape(2 * cw1, k2w)

    bias1 = np.zeros((1, k2w), np.float32)
    for ki in range(K2):
        for co in range(C1):
            bias1[0, ki * pw1 + co * hp1:ki * pw1 + (co + 1) * hp1] = b1[co]
    ent["bias1"] = bias1

    m2k = np.zeros((K2, k2w), np.float32)
    for ki in range(K2):
        m2k[ki, ki * pw1:(ki + 1) * pw1] = 1.0
    ent["m2k"] = m2k

    b2w = np.zeros((k2w, cw2), np.float32)               # fused conv2 weight
    for ki in range(K2):
        for ci in range(C1):
            for m in range(hp1):
                for co in range(C2):
                    for w in range(h2):
                        kj = m + PAD - w
                        if 0 <= kj < K2:
                            b2w[ki * pw1 + ci * hp1 + m, co * h2 + w] = w2[co, ci, ki, kj]
    ent["b2w"] = b2w

    sw2 = np.zeros((2, cw2, fw), np.float32)             # col pool + hp2x replicate
    for j in range(2):
        for co in range(C2):
            for q in range(hp2):
                for h in range(hp2):
                    sw2[j, co * h2 + 2 * q + j, h * pw2 + co * hp2 + q] = 1.0
    ent["sw2"] = sw2.reshape(2 * cw2, fw)

    bias2 = np.zeros((1, fw), np.float32)
    for h in range(hp2):
        for co in range(C2):
            bias2[0, h * pw2 + co * hp2:h * pw2 + (co + 1) * hp2] = b2[co]
    ent["bias2"] = bias2

    fmask = np.zeros((hp2, fw), np.float32)              # flatten lane-group masks
    for r in range(hp2):
        fmask[r, r * pw2:(r + 1) * pw2] = 1.0
    ent["fmask"] = fmask

    wl1f = np.zeros((fw, l1o), np.float32)               # l1 weight, flatten folded
    for h in range(hp2):
        for co in range(C2):
            for w in range(hp2):
                wl1f[h * pw2 + co * hp2 + w, :] = wl1[:, co * hp2 * hp2 + h * hp2 + w]
    ent["wl1"] = wl1f
    ent["bl1"] = np.asarray(p["bl1"], np.float32)[None, :]
    ent["wl2"] = np.asarray(p["wl2"], np.float32).T.copy()
    ent["bl2"] = np.asarray(p["bl2"], np.float32)[None, :]
    ent["wl3"] = np.asarray(p["wl3"], np.float32).T.copy()
    ent["bl3"] = np.asarray(p["bl3"], np.float32)[None, :]

    pack = np.zeros((total, PACK_W), np.float32)
    for name, arr in ent.items():
        r0 = offs[name]
        rr, cc = shapes[name]
        assert arr.shape == (rr, cc), (name, arr.shape, (rr, cc))
        pack[r0:r0 + rr, 0:cc] = arr
    return jnp.asarray(pack)


def init_params(key, n_in, n_out):
    h1, hp1, h2, hp2 = _dims(n_in)
    lin1_in = C2 * hp2 * hp2
    lin1_out = lin1_in // 2

    def uni(k, shape, fan_in):
        bound = 1.0 / float(fan_in) ** 0.5
        return jax.random.uniform(k, shape, jnp.float32, -bound, bound)

    ks = jax.random.split(key, 10)
    p = {
        "w1": uni(ks[0], (C1, 1, K1, K1), 1 * K1 * K1),
        "b1": uni(ks[1], (C1,), 1 * K1 * K1),
        "w2": uni(ks[2], (C2, C1, K2, K2), C1 * K2 * K2),
        "b2": uni(ks[3], (C2,), C1 * K2 * K2),
        "wl1": uni(ks[4], (lin1_out, lin1_in), lin1_in),
        "bl1": uni(ks[5], (lin1_out,), lin1_in),
        "wl2": uni(ks[6], (30, lin1_out), lin1_out),
        "bl2": uni(ks[7], (30,), lin1_out),
        "wl3": uni(ks[8], (n_out, 30), 30),
        "bl3": uni(ks[9], (n_out,), 30),
    }
    p["pack"] = _build_pack(p, n_in, n_out)
    return p


# ------------------------- pure-JAX reference check ------------------------

def ref_forward(x, p):
    dn = ("NCHW", "OIHW", "NCHW")
    y = lax.conv_general_dilated(x, p["w1"], (1, 1), ((3, 3), (3, 3)),
                                 dimension_numbers=dn) + p["b1"][None, :, None, None]
    y = jnp.maximum(y, 0.0)
    y = lax.reduce_window(y, -jnp.inf, lax.max, (1, 1, 2, 2), (1, 1, 2, 2), "VALID")
    y = lax.conv_general_dilated(y, p["w2"], (1, 1), ((3, 3), (3, 3)),
                                 dimension_numbers=dn) + p["b2"][None, :, None, None]
    y = jnp.maximum(y, 0.0)
    y = lax.reduce_window(y, -jnp.inf, lax.max, (1, 1, 2, 2), (1, 1, 2, 2), "VALID")
    y = y.reshape(y.shape[0], -1)
    y = jnp.maximum(y @ p["wl1"].T + p["bl1"], 0.0)
    y = jnp.maximum(y @ p["wl2"].T + p["bl2"], 0.0)
    return y @ p["wl3"].T + p["bl3"]


if __name__ == "__main__":
    n_in, n_out, batch = 16, 10, 2
    key = jax.random.PRNGKey(0)
    kx, kp = jax.random.split(key)
    x = jax.random.normal(kx, (batch, 1, n_in, n_in), jnp.float32)
    params = init_params(kp, n_in, n_out)

    fwd = jax.jit(functools.partial(net5_forward, n_out=n_out))
    out = jax.block_until_ready(fwd(x, params["pack"]))
    assert out.shape == (batch, n_out), out.shape

    ref = ref_forward(x, params)
    err = float(jnp.max(jnp.abs(out - ref)))
    if err < 1e-3:
        print("KERNEL_OK")
    else:
        print(f"MISMATCH max_abs_err={err}")
</pallas_src>

<mosaic_0001>
module attributes {stable_mosaic.version = 11 : i64} {
  func.func @kernel(%arg0: memref<32x16xf32, #tpu.memory_space<vmem>>, %arg1: memref<600x128xf32, #tpu.memory_space<vmem>>, %arg2: memref<2x10xf32, #tpu.memory_space<vmem>>, %arg3: memref<44x96xf32, #tpu.memory_space<vmem>>, %arg4: memref<34x96xf32, #tpu.memory_space<vmem>>, %arg5: memref<16x68xf32, #tpu.memory_space<vmem>>, %arg6: memref<28x96xf32, #tpu.memory_space<vmem>>, %arg7: memref<24x96xf32, #tpu.memory_space<vmem>>, %arg8: memref<12x24xf32, #tpu.memory_space<vmem>>, %arg9: memref<2x72xf32, #tpu.memory_space<vmem>>) attributes {dimension_semantics = [], scalar_prefetch = 0 : i64, scratch_operands = 7 : i64, tpu.core_type = #tpu.core_type<tc>} {
    %cst = arith.constant 0.000000e+00 : f32
    %0 = vector.broadcast %cst : f32 to vector<3x96xf32>
    %cst_0 = arith.constant 0.000000e+00 : f32
    %1 = vector.broadcast %cst_0 : f32 to vector<3x96xf32>
    %c0 = arith.constant 0 : index
    %c0_1 = arith.constant 0 : index
    %2 = vector.load %arg0[%c0, %c0_1] : memref<32x16xf32, #tpu.memory_space<vmem>>, vector<32x16xf32>
    %c0_2 = arith.constant 0 : index
    %c0_3 = arith.constant 0 : index
    %3 = vector.load %arg1[%c0_2, %c0_3] : memref<600x128xf32, #tpu.memory_space<vmem>>, vector<16x96xf32>
    %cst_4 = arith.constant dense<0.000000e+00> : vector<32x96xf32>
    %4 = tpu.matmul %2, %3, %cst_4 {dimension_numbers = #tpu.dot_dimension_numbers<[1], [0], [0], [1], [0, 0, 1, 1], [], []>} : vector<32x16xf32>, vector<16x96xf32>, vector<32x96xf32> -> vector<32x96xf32>
    %c0_5 = arith.constant 0 : index
    %c0_6 = arith.constant 0 : index
    %5 = vector.load %arg3[%c0_5, %c0_6] : memref<44x96xf32, #tpu.memory_space<vmem>>, vector<3x96xf32>
    tpu.vector_store %arg3[%c0_5, %c0_6], %0 {strides = array<i32>} : memref<44x96xf32, #tpu.memory_space<vmem>>, vector<3x96xf32>,
    %6 = vector.extract_strided_slice %4 {offsets = [0, 0], sizes = [16, 96], strides = [1, 1]} : vector<32x96xf32> to vector<16x96xf32>
    %c3 = arith.constant 3 : index
    %c0_7 = arith.constant 0 : index
    %7 = vector.load %arg3[%c3, %c0_7] : memref<44x96xf32, #tpu.memory_space<vmem>>, vector<16x96xf32>
    tpu.vector_store %arg3[%c3, %c0_7], %6 {strides = array<i32>} : memref<44x96xf32, #tpu.memory_space<vmem>>, vector<16x96xf32>,
    %c19 = arith.constant 19 : index
    %c0_8 = arith.constant 0 : index
    %8 = vector.load %arg3[%c19, %c0_8] : memref<44x96xf32, #tpu.memory_space<vmem>>, vector<3x96xf32>
    tpu.vector_store %arg3[%c19, %c0_8], %0 {strides = array<i32>} : memref<44x96xf32, #tpu.memory_space<vmem>>, vector<3x96xf32>,
    %c22 = arith.constant 22 : index
    %c0_9 = arith.constant 0 : index
    %9 = vector.load %arg3[%c22, %c0_9] : memref<44x96xf32, #tpu.memory_space<vmem>>, vector<3x96xf32>
    tpu.vector_store %arg3[%c22, %c0_9], %0 {strides = array<i32>} : memref<44x96xf32, #tpu.memory_space<vmem>>, vector<3x96xf32>,
    %10 = vector.extract_strided_slice %4 {offsets = [16, 0], sizes = [16, 96], strides = [1, 1]} : vector<32x96xf32> to vector<16x96xf32>
    %c25 = arith.constant 25 : index
    %c0_10 = arith.constant 0 : index
    %11 = vector.load %arg3[%c25, %c0_10] : memref<44x96xf32, #tpu.memory_space<vmem>>, vector<16x96xf32>
    tpu.vector_store %arg3[%c25, %c0_10], %10 {strides = array<i32>} : memref<44x96xf32, #tpu.memory_space<vmem>>, vector<16x96xf32>,
    %c41 = arith.constant 41 : index
    %c0_11 = arith.constant 0 : index
    %12 = vector.load %arg3[%c41, %c0_11] : memref<44x96xf32, #tpu.memory_space<vmem>>, vector<3x96xf32>
    tpu.vector_store %arg3[%c41, %c0_11], %0 {strides = array<i32>} : memref<44x96xf32, #tpu.memory_space<vmem>>, vector<3x96xf32>,
    %c16 = arith.constant 16 : index
    %c0_12 = arith.constant 0 : index
    %13 = vector.load %arg1[%c16, %c0_12] : memref<600x128xf32, #tpu.memory_space<vmem>>, vector<1x96xf32>
    %c17 = arith.constant 17 : index
    %c0_13 = arith.constant 0 : index
    %14 = vector.load %arg1[%c17, %c0_13] : memref<600x128xf32, #tpu.memory_space<vmem>>, vector<1x96xf32>
    %c18 = arith.constant 18 : index
    %c0_14 = arith.constant 0 : index
    %15 = vector.load %arg1[%c18, %c0_14] : memref<600x128xf32, #tpu.memory_space<vmem>>, vector<1x96xf32>
    %c19_15 = arith.constant 19 : index
    %c0_16 = arith.constant 0 : index
    %16 = vector.load %arg1[%c19_15, %c0_16] : memref<600x128xf32, #tpu.memory_space<vmem>>, vector<1x96xf32>
    %c20 = arith.constant 20 : index
    %c0_17 = arith.constant 0 : index
    %17 = vector.load %arg1[%c20, %c0_17] : memref<600x128xf32, #tpu.memory_space<vmem>>, vector<1x96xf32>
    %c21 = arith.constant 21 : index
    %c0_18 = arith.constant 0 : index
    %18 = vector.load %arg1[%c21, %c0_18] : memref<600x128xf32, #tpu.memory_space<vmem>>, vector<1x96xf32>
    %c0_19 = arith.constant 0 : index
    %c0_20 = arith.constant 0 : index
    %19 = vector.load %arg3[%c0_19, %c0_20] : memref<44x96xf32, #tpu.memory_space<vmem>>, vector<17x96xf32>
    %20 = vector.broadcast %13 : vector<1x96xf32> to vector<17x96xf32>
    %21 = arith.mulf %20, %19 : vector<17x96xf32>
    %c1 = arith.constant 1 : index
    %c0_21 = arith.constant 0 : index
    %22 = vector.load %arg3[%c1, %c0_21] : memref<44x96xf32, #tpu.memory_space<vmem>>, vector<17x96xf32>
    %23 = vector.broadcast %14 : vector<1x96xf32> to vector<17x96xf32>
    %24 = arith.mulf %23, %22 : vector<17x96xf32>
    %25 = arith.addf %21, %24 : vector<17x96xf32>
    %c2 = arith.constant 2 : index
    %c0_22 = arith.constant 0 : index
    %26 = vector.load %arg3[%c2, %c0_22] : memref<44x96xf32, #tpu.memory_space<vmem>>, vector<17x96xf32>
    %27 = vector.broadcast %15 : vector<1x96xf32> to vector<17x96xf32>
    %28 = arith.mulf %27, %26 : vector<17x96xf32>
    %29 = arith.addf %25, %28 : vector<17x96xf32>
    %c3_23 = arith.constant 3 : index
    %c0_24 = arith.constant 0 : index
    %30 = vector.load %arg3[%c3_23, %c0_24] : memref<44x96xf32, #tpu.memory_space<vmem>>, vector<17x96xf32>
    %31 = vector.broadcast %16 : vector<1x96xf32> to vector<17x96xf32>
    %32 = arith.mulf %31, %30 : vector<17x96xf32>
    %33 = arith.addf %29, %32 : vector<17x96xf32>
    %c4 = arith.constant 4 : index
    %c0_25 = arith.constant 0 : index
    %34 = vector.load %arg3[%c4, %c0_25] : memref<44x96xf32, #tpu.memory_space<vmem>>, vector<17x96xf32>
    %35 = vector.broadcast %17 : vector<1x96xf32> to vector<17x96xf32>
    %36 = arith.mulf %35, %34 : vector<17x96xf32>
    %37 = arith.addf %33, %36 : vector<17x96xf32>
    %c5 = arith.constant 5 : index
    %c0_26 = arith.constant 0 : index
    %38 = vector.load %arg3[%c5, %c0_26] : memref<44x96xf32, #tpu.memory_space<vmem>>, vector<17x96xf32>
    %39 = vector.broadcast %18 : vector<1x96xf32> to vector<17x96xf32>
    %40 = arith.mulf %39, %38 : vector<17x96xf32>
    %41 = arith.addf %37, %40 : vector<17x96xf32>
    %c0_27 = arith.constant 0 : index
    %c0_28 = arith.constant 0 : index
    %42 = vector.load %arg4[%c0_27, %c0_28] : memref<34x96xf32, #tpu.memory_space<vmem>>, vector<17x96xf32>
    tpu.vector_store %arg4[%c0_27, %c0_28], %41 {strides = array<i32>} : memref<34x96xf32, #tpu.memory_space<vmem>>, vector<17x96xf32>,
    %c22_29 = arith.constant 22 : index
    %c0_30 = arith.constant 0 : index
    %43 = vector.load %arg3[%c22_29, %c0_30] : memref<44x96xf32, #tpu.memory_space<vmem>>, vector<17x96xf32>
    %44 = vector.broadcast %13 : vector<1x96xf32> to vector<17x96xf32>
    %45 = arith.mulf %44, %43 : vector<17x96xf32>
    %c23 = arith.constant 23 : index
    %c0_31 = arith.constant 0 : index
    %46 = vector.load %arg3[%c23, %c0_31] : memref<44x96xf32, #tpu.memory_space<vmem>>, vector<17x96xf32>
    %47 = vector.broadcast %14 : vector<1x96xf32> to vector<17x96xf32>
    %48 = arith.mulf %47, %46 : vector<17x96xf32>
    %49 = arith.addf %45, %48 : vector<17x96xf32>
    %c24 = arith.constant 24 : index
    %c0_32 = arith.constant 0 : index
    %50 = vector.load %arg3[%c24, %c0_32] : memref<44x96xf32, #tpu.memory_space<vmem>>, vector<17x96xf32>
    %51 = vector.broadcast %15 : vector<1x96xf32> to vector<17x96xf32>
    %52 = arith.mulf %51, %50 : vector<17x96xf32>
    %53 = arith.addf %49, %52 : vector<17x96xf32>
    %c25_33 = arith.constant 25 : index
    %c0_34 = arith.constant 0 : index
    %54 = vector.load %arg3[%c25_33, %c0_34] : memref<44x96xf32, #tpu.memory_space<vmem>>, vector<17x96xf32>
    %55 = vector.broadcast %16 : vector<1x96xf32> to vector<17x96xf32>
    %56 = arith.mulf %55, %54 : vector<17x96xf32>
    %57 = arith.addf %53, %56 : vector<17x96xf32>
    %c26 = arith.constant 26 : index
    %c0_35 = arith.constant 0 : index
    %58 = vector.load %arg3[%c26, %c0_35] : memref<44x96xf32, #tpu.memory_space<vmem>>, vector<17x96xf32>
    %59 = vector.broadcast %17 : vector<1x96xf32> to vector<17x96xf32>
    %60 = arith.mulf %59, %58 : vector<17x96xf32>
    %61 = arith.addf %57, %60 : vector<17x96xf32>
    %c27 = arith.constant 27 : index
    %c0_36 = arith.constant 0 : index
    %62 = vector.load %arg3[%c27, %c0_36] : memref<44x96xf32, #tpu.memory_space<vmem>>, vector<17x96xf32>
    %63 = vector.broadcast %18 : vector<1x96xf32> to vector<17x96xf32>
    %64 = arith.mulf %63, %62 : vector<17x96xf32>
    %65 = arith.addf %61, %64 : vector<17x96xf32>
    %c17_37 = arith.constant 17 : index
    %c0_38 = arith.constant 0 : index
    %66 = vector.load %arg4[%c17_37, %c0_38] : memref<34x96xf32, #tpu.memory_space<vmem>>, vector<17x96xf32>
    tpu.vector_store %arg4[%c17_37, %c0_38], %65 {strides = array<i32>} : memref<34x96xf32, #tpu.memory_space<vmem>>, vector<17x96xf32>,
    %c0_39 = arith.constant 0 : index
    %c0_40 = arith.constant 0 : index
    %67 = vector.load %arg4[%c0_39, %c0_40] : memref<34x96xf32, #tpu.memory_space<vmem>>, vector<34x96xf32>
    %c24_41 = arith.constant 24 : index
    %c0_42 = arith.constant 0 : index
    %68 = vector.load %arg1[%c24_41, %c0_42] : memref<600x128xf32, #tpu.memory_space<vmem>>, vector<96x68xf32>
    %cst_43 = arith.constant dense<0.000000e+00> : vector<34x68xf32>
    %69 = tpu.matmul %67, %68, %cst_43 {dimension_numbers = #tpu.dot_dimension_numbers<[1], [0], [0], [1], [0, 0, 1, 1], [], []>} : vector<34x96xf32>, vector<96x68xf32>, vector<34x68xf32> -> vector<34x68xf32>
    %70 = vector.extract_strided_slice %69 {offsets = [0, 0], sizes = [1, 68], strides = [1, 1]} : vector<34x68xf32> to vector<1x68xf32>
    %71 = vector.extract_strided_slice %69 {offsets = [1, 0], sizes = [1, 68], strides = [1, 1]} : vector<34x68xf32> to vector<1x68xf32>
    %72 = arith.maximumf %70, %71 : vector<1x68xf32>
    %c0_44 = arith.constant 0 : index
    %c0_45 = arith.constant 0 : index
    %73 = vector.load %arg5[%c0_44, %c0_45] : memref<16x68xf32, #tpu.memory_space<vmem>>, vector<1x68xf32>
    tpu.vector_store %arg5[%c0_44, %c0_45], %72 {strides = array<i32>} : memref<16x68xf32, #tpu.memory_space<vmem>>, vector<1x68xf32>,
    %74 = vector.extract_strided_slice %69 {offsets = [2, 0], sizes = [1, 68], strides = [1, 1]} : vector<34x68xf32> to vector<1x68xf32>
    %75 = vector.extract_strided_slice %69 {offsets = [3, 0], sizes = [1, 68], strides = [1, 1]} : vector<34x68xf32> to vector<1x68xf32>
    %76 = arith.maximumf %74, %75 : vector<1x68xf32>
    %c1_46 = arith.constant 1 : index
    %c0_47 = arith.constant 0 : index
    %77 = vector.load %arg5[%c1_46, %c0_47] : memref<16x68xf32, #tpu.memory_space<vmem>>, vector<1x68xf32>
    tpu.vector_store %arg5[%c1_46, %c0_47], %76 {strides = array<i32>} : memref<16x68xf32, #tpu.memory_space<vmem>>, vector<1x68xf32>,
    %78 = vector.extract_strided_slice %69 {offsets = [4, 0], sizes = [1, 68], strides = [1, 1]} : vector<34x68xf32> to vector<1x68xf32>
    %79 = vector.extract_strided_slice %69 {offsets = [5, 0], sizes = [1, 68], strides = [1, 1]} : vector<34x68xf32> to vector<1x68xf32>
    %80 = arith.maximumf %78, %79 : vector<1x68xf32>
    %c2_48 = arith.constant 2 : index
    %c0_49 = arith.constant 0 : index
    %81 = vector.load %arg5[%c2_48, %c0_49] : memref<16x68xf32, #tpu.memory_space<vmem>>, vector<1x68xf32>
    tpu.vector_store %arg5[%c2_48, %c0_49], %80 {strides = array<i32>} : memref<16x68xf32, #tpu.memory_space<vmem>>, vector<1x68xf32>,
    %82 = vector.extract_strided_slice %69 {offsets = [6, 0], sizes = [1, 68], strides = [1, 1]} : vector<34x68xf32> to vector<1x68xf32>
    %83 = vector.extract_strided_slice %69 {offsets = [7, 0], sizes = [1, 68], strides = [1, 1]} : vector<34x68xf32> to vector<1x68xf32>
    %84 = arith.maximumf %82, %83 : vector<1x68xf32>
    %c3_50 = arith.constant 3 : index
    %c0_51 = arith.constant 0 : index
    %85 = vector.load %arg5[%c3_50, %c0_51] : memref<16x68xf32, #tpu.memory_space<vmem>>, vector<1x68xf32>
    tpu.vector_store %arg5[%c3_50, %c0_51], %84 {strides = array<i32>} : memref<16x68xf32, #tpu.memory_space<vmem>>, vector<1x68xf32>,
    %86 = vector.extract_strided_slice %69 {offsets = [8, 0], sizes = [1, 68], strides = [1, 1]} : vector<34x68xf32> to vector<1x68xf32>
    %87 = vector.extract_strided_slice %69 {offsets = [9, 0], sizes = [1, 68], strides = [1, 1]} : vector<34x68xf32> to vector<1x68xf32>
    %88 = arith.maximumf %86, %87 : vector<1x68xf32>
    %c4_52 = arith.constant 4 : index
    %c0_53 = arith.constant 0 : index
    %89 = vector.load %arg5[%c4_52, %c0_53] : memref<16x68xf32, #tpu.memory_space<vmem>>, vector<1x68xf32>
    tpu.vector_store %arg5[%c4_52, %c0_53], %88 {strides = array<i32>} : memref<16x68xf32, #tpu.memory_space<vmem>>, vector<1x68xf32>,
    %90 = vector.extract_strided_slice %69 {offsets = [10, 0], sizes = [1, 68], strides = [1, 1]} : vector<34x68xf32> to vector<1x68xf32>
    %91 = vector.extract_strided_slice %69 {offsets = [11, 0], sizes = [1, 68], strides = [1, 1]} : vector<34x68xf32> to vector<1x68xf32>
    %92 = arith.maximumf %90, %91 : vector<1x68xf32>
    %c5_54 = arith.constant 5 : index
    %c0_55 = arith.constant 0 : index
    %93 = vector.load %arg5[%c5_54, %c0_55] : memref<16x68xf32, #tpu.memory_space<vmem>>, vector<1x68xf32>
    tpu.vector_store %arg5[%c5_54, %c0_55], %92 {strides = array<i32>} : memref<16x68xf32, #tpu.memory_space<vmem>>, vector<1x68xf32>,
    %94 = vector.extract_strided_slice %69 {offsets = [12, 0], sizes = [1, 68], strides = [1, 1]} : vector<34x68xf32> to vector<1x68xf32>
    %95 = vector.extract_strided_slice %69 {offsets = [13, 0], sizes = [1, 68], strides = [1, 1]} : vector<34x68xf32> to vector<1x68xf32>
    %96 = arith.maximumf %94, %95 : vector<1x68xf32>
    %c6 = arith.constant 6 : index
    %c0_56 = arith.constant 0 : index
    %97 = vector.load %arg5[%c6, %c0_56] : memref<16x68xf32, #tpu.memory_space<vmem>>, vector<1x68xf32>
    tpu.vector_store %arg5[%c6, %c0_56], %96 {strides = array<i32>} : memref<16x68xf32, #tpu.memory_space<vmem>>, vector<1x68xf32>,
    %98 = vector.extract_strided_slice %69 {offsets = [14, 0], sizes = [1, 68], strides = [1, 1]} : vector<34x68xf32> to vector<1x68xf32>
    %99 = vector.extract_strided_slice %69 {offsets = [15, 0], sizes = [1, 68], strides = [1, 1]} : vector<34x68xf32> to vector<1x68xf32>
    %100 = arith.maximumf %98, %99 : vector<1x68xf32>
    %c7 = arith.constant 7 : index
    %c0_57 = arith.constant 0 : index
    %101 = vector.load %arg5[%c7, %c0_57] : memref<16x68xf32, #tpu.memory_space<vmem>>, vector<1x68xf32>
    tpu.vector_store %arg5[%c7, %c0_57], %100 {strides = array<i32>} : memref<16x68xf32, #tpu.memory_space<vmem>>, vector<1x68xf32>,
    %102 = vector.extract_strided_slice %69 {offsets = [17, 0], sizes = [1, 68], strides = [1, 1]} : vector<34x68xf32> to vector<1x68xf32>
    %103 = vector.extract_strided_slice %69 {offsets = [18, 0], sizes = [1, 68], strides = [1, 1]} : vector<34x68xf32> to vector<1x68xf32>
    %104 = arith.maximumf %102, %103 : vector<1x68xf32>
    %c8 = arith.constant 8 : index
    %c0_58 = arith.constant 0 : index
    %105 = vector.load %arg5[%c8, %c0_58] : memref<16x68xf32, #tpu.memory_space<vmem>>, vector<1x68xf32>
    tpu.vector_store %arg5[%c8, %c0_58], %104 {strides = array<i32>} : memref<16x68xf32, #tpu.memory_space<vmem>>, vector<1x68xf32>,
    %106 = vector.extract_strided_slice %69 {offsets = [19, 0], sizes = [1, 68], strides = [1, 1]} : vector<34x68xf32> to vector<1x68xf32>
    %107 = vector.extract_strided_slice %69 {offsets = [20, 0], sizes = [1, 68], strides = [1, 1]} : vector<34x68xf32> to vector<1x68xf32>
    %108 = arith.maximumf %106, %107 : vector<1x68xf32>
    %c9 = arith.constant 9 : index
    %c0_59 = arith.constant 0 : index
    %109 = vector.load %arg5[%c9, %c0_59] : memref<16x68xf32, #tpu.memory_space<vmem>>, vector<1x68xf32>
    tpu.vector_store %arg5[%c9, %c0_59], %108 {strides = array<i32>} : memref<16x68xf32, #tpu.memory_space<vmem>>, vector<1x68xf32>,
    %110 = vector.extract_strided_slice %69 {offsets = [21, 0], sizes = [1, 68], strides = [1, 1]} : vector<34x68xf32> to vector<1x68xf32>
    %111 = vector.extract_strided_slice %69 {offsets = [22, 0], sizes = [1, 68], strides = [1, 1]} : vector<34x68xf32> to vector<1x68xf32>
    %112 = arith.maximumf %110, %111 : vector<1x68xf32>
    %c10 = arith.constant 10 : index
    %c0_60 = arith.constant 0 : index
    %113 = vector.load %arg5[%c10, %c0_60] : memref<16x68xf32, #tpu.memory_space<vmem>>, vector<1x68xf32>
    tpu.vector_store %arg5[%c10, %c0_60], %112 {strides = array<i32>} : memref<16x68xf32, #tpu.memory_space<vmem>>, vector<1x68xf32>,
    %114 = vector.extract_strided_slice %69 {offsets = [23, 0], sizes = [1, 68], strides = [1, 1]} : vector<34x68xf32> to vector<1x68xf32>
    %115 = vector.extract_strided_slice %69 {offsets = [24, 0], sizes = [1, 68], strides = [1, 1]} : vector<34x68xf32> to vector<1x68xf32>
    %116 = arith.maximumf %114, %115 : vector<1x68xf32>
    %c11 = arith.constant 11 : index
    %c0_61 = arith.constant 0 : index
    %117 = vector.load %arg5[%c11, %c0_61] : memref<16x68xf32, #tpu.memory_space<vmem>>, vector<1x68xf32>
    tpu.vector_store %arg5[%c11, %c0_61], %116 {strides = array<i32>} : memref<16x68xf32, #tpu.memory_space<vmem>>, vector<1x68xf32>,
    %118 = vector.extract_strided_slice %69 {offsets = [25, 0], sizes = [1, 68], strides = [1, 1]} : vector<34x68xf32> to vector<1x68xf32>
    %119 = vector.extract_strided_slice %69 {offsets = [26, 0], sizes = [1, 68], strides = [1, 1]} : vector<34x68xf32> to vector<1x68xf32>
    %120 = arith.maximumf %118, %119 : vector<1x68xf32>
    %c12 = arith.constant 12 : index
    %c0_62 = arith.constant 0 : index
    %121 = vector.load %arg5[%c12, %c0_62] : memref<16x68xf32, #tpu.memory_space<vmem>>, vector<1x68xf32>
    tpu.vector_store %arg5[%c12, %c0_62], %120 {strides = array<i32>} : memref<16x68xf32, #tpu.memory_space<vmem>>, vector<1x68xf32>,
    %122 = vector.extract_strided_slice %69 {offsets = [27, 0], sizes = [1, 68], strides = [1, 1]} : vector<34x68xf32> to vector<1x68xf32>
    %123 = vector.extract_strided_slice %69 {offsets = [28, 0], sizes = [1, 68], strides = [1, 1]} : vector<34x68xf32> to vector<1x68xf32>
    %124 = arith.maximumf %122, %123 : vector<1x68xf32>
    %c13 = arith.constant 13 : index
    %c0_63 = arith.constant 0 : index
    %125 = vector.load %arg5[%c13, %c0_63] : memref<16x68xf32, #tpu.memory_space<vmem>>, vector<1x68xf32>
    tpu.vector_store %arg5[%c13, %c0_63], %124 {strides = array<i32>} : memref<16x68xf32, #tpu.memory_space<vmem>>, vector<1x68xf32>,
    %126 = vector.extract_strided_slice %69 {offsets = [29, 0], sizes = [1, 68], strides = [1, 1]} : vector<34x68xf32> to vector<1x68xf32>
    %127 = vector.extract_strided_slice %69 {offsets = [30, 0], sizes = [1, 68], strides = [1, 1]} : vector<34x68xf32> to vector<1x68xf32>
    %128 = arith.maximumf %126, %127 : vector<1x68xf32>
    %c14 = arith.constant 14 : index
    %c0_64 = arith.constant 0 : index
    %129 = vector.load %arg5[%c14, %c0_64] : memref<16x68xf32, #tpu.memory_space<vmem>>, vector<1x68xf32>
    tpu.vector_store %arg5[%c14, %c0_64], %128 {strides = array<i32>} : memref<16x68xf32, #tpu.memory_space<vmem>>, vector<1x68xf32>,
    %130 = vector.extract_strided_slice %69 {offsets = [31, 0], sizes = [1, 68], strides = [1, 1]} : vector<34x68xf32> to vector<1x68xf32>
    %131 = vector.extract_strided_slice %69 {offsets = [32, 0], sizes = [1, 68], strides = [1, 1]} : vector<34x68xf32> to vector<1x68xf32>
    %132 = arith.maximumf %130, %131 : vector<1x68xf32>
    %c15 = arith.constant 15 : index
    %c0_65 = arith.constant 0 : index
    %133 = vector.load %arg5[%c15, %c0_65] : memref<16x68xf32, #tpu.memory_space<vmem>>, vector<1x68xf32>
    tpu.vector_store %arg5[%c15, %c0_65], %132 {strides = array<i32>} : memref<16x68xf32, #tpu.memory_space<vmem>>, vector<1x68xf32>,
    %c0_66 = arith.constant 0 : index
    %c0_67 = arith.constant 0 : index
    %134 = vector.load %arg5[%c0_66, %c0_67] : memref<16x68xf32, #tpu.memory_space<vmem>>, vector<16x68xf32>
    %c120 = arith.constant 120 : index
    %c0_68 = arith.constant 0 : index
    %135 = vector.load %arg1[%c120, %c0_68] : memref<600x128xf32, #tpu.memory_space<vmem>>, vector<68x96xf32>
    %c188 = arith.constant 188 : index
    %c0_69 = arith.constant 0 : index
    %136 = vector.load %arg1[%c188, %c0_69] : memref<600x128xf32, #tpu.memory_space<vmem>>, vector<68x96xf32>
    %cst_70 = arith.constant dense<0.000000e+00> : vector<16x96xf32>
    %137 = tpu.matmul %134, %135, %cst_70 {dimension_numbers = #tpu.dot_dimension_numbers<[1], [0], [0], [1], [0, 0, 1, 1], [], []>} : vector<16x68xf32>, vector<68x96xf32>, vector<16x96xf32> -> vector<16x96xf32>
    %cst_71 = arith.constant dense<0.000000e+00> : vector<16x96xf32>
    %138 = tpu.matmul %134, %136, %cst_71 {dimension_numbers = #tpu.dot_dimension_numbers<[1], [0], [0], [1], [0, 0, 1, 1], [], []>} : vector<16x68xf32>, vector<68x96xf32>, vector<16x96xf32> -> vector<16x96xf32>
    %139 = arith.maximumf %137, %138 : vector<16x96xf32>
    %c256 = arith.constant 256 : index
    %c0_72 = arith.constant 0 : index
    %140 = vector.load %arg1[%c256, %c0_72] : memref<600x128xf32, #tpu.memory_space<vmem>>, vector<1x96xf32>
    %141 = vector.broadcast %140 : vector<1x96xf32> to vector<16x96xf32>
    %142 = arith.addf %139, %141 : vector<16x96xf32>
    %cst_73 = arith.constant 0.000000e+00 : f32
    %143 = vector.broadcast %cst_73 : f32 to vector<16x96xf32>
    %144 = arith.maximumf %142, %143 : vector<16x96xf32>
    %c0_74 = arith.constant 0 : index
    %c0_75 = arith.constant 0 : index
    %145 = vector.load %arg6[%c0_74, %c0_75] : memref<28x96xf32, #tpu.memory_space<vmem>>, vector<3x96xf32>
    tpu.vector_store %arg6[%c0_74, %c0_75], %1 {strides = array<i32>} : memref<28x96xf32, #tpu.memory_space<vmem>>, vector<3x96xf32>,
    %146 = vector.extract_strided_slice %144 {offsets = [0, 0], sizes = [8, 96], strides = [1, 1]} : vector<16x96xf32> to vector<8x96xf32>
    %c3_76 = arith.constant 3 : index
    %c0_77 = arith.constant 0 : index
    %147 = vector.load %arg6[%c3_76, %c0_77] : memref<28x96xf32, #tpu.memory_space<vmem>>, vector<8x96xf32>
    tpu.vector_store %arg6[%c3_76, %c0_77], %146 {strides = array<i32>} : memref<28x96xf32, #tpu.memory_space<vmem>>, vector<8x96xf32>,
    %c11_78 = arith.constant 11 : index
    %c0_79 = arith.constant 0 : index
    %148 = vector.load %arg6[%c11_78, %c0_79] : memref<28x96xf32, #tpu.memory_space<vmem>>, vector<3x96xf32>
    tpu.vector_store %arg6[%c11_78, %c0_79], %1 {strides = array<i32>} : memref<28x96xf32, #tpu.memory_space<vmem>>, vector<3x96xf32>,
    %c14_80 = arith.constant 14 : index
    %c0_81 = arith.constant 0 : index
    %149 = vector.load %arg6[%c14_80, %c0_81] : memref<28x96xf32, #tpu.memory_space<vmem>>, vector<3x96xf32>
    tpu.vector_store %arg6[%c14_80, %c0_81], %1 {strides = array<i32>} : memref<28x96xf32, #tpu.memory_space<vmem>>, vector<3x96xf32>,
    %150 = vector.extract_strided_slice %144 {offsets = [8, 0], sizes = [8, 96], strides = [1, 1]} : vector<16x96xf32> to vector<8x96xf32>
    %c17_82 = arith.constant 17 : index
    %c0_83 = arith.constant 0 : index
    %151 = vector.load %arg6[%c17_82, %c0_83] : memref<28x96xf32, #tpu.memory_space<vmem>>, vector<8x96xf32>
    tpu.vector_store %arg6[%c17_82, %c0_83], %150 {strides = array<i32>} : memref<28x96xf32, #tpu.memory_space<vmem>>, vector<8x96xf32>,
    %c25_84 = arith.constant 25 : index
    %c0_85 = arith.constant 0 : index
    %152 = vector.load %arg6[%c25_84, %c0_85] : memref<28x96xf32, #tpu.memory_space<vmem>>, vector<3x96xf32>
    tpu.vector_store %arg6[%c25_84, %c0_85], %1 {strides = array<i32>} : memref<28x96xf32, #tpu.memory_space<vmem>>, vector<3x96xf32>,
    %c264 = arith.constant 264 : index
    %c0_86 = arith.constant 0 : index
    %153 = vector.load %arg1[%c264, %c0_86] : memref<600x128xf32, #tpu.memory_space<vmem>>, vector<1x96xf32>
    %c265 = arith.constant 265 : index
    %c0_87 = arith.constant 0 : index
    %154 = vector.load %arg1[%c265, %c0_87] : memref<600x128xf32, #tpu.memory_space<vmem>>, vector<1x96xf32>
    %c266 = arith.constant 266 : index
    %c0_88 = arith.constant 0 : index
    %155 = vector.load %arg1[%c266, %c0_88] : memref<600x128xf32, #tpu.memory_space<vmem>>, vector<1x96xf32>
    %c0_89 = arith.constant 0 : index
    %c0_90 = arith.constant 0 : index
    %156 = vector.load %arg6[%c0_89, %c0_90] : memref<28x96xf32, #tpu.memory_space<vmem>>, vector<12x96xf32>
    %157 = vector.broadcast %153 : vector<1x96xf32> to vector<12x96xf32>
    %158 = arith.mulf %157, %156 : vector<12x96xf32>
    %c1_91 = arith.constant 1 : index
    %c0_92 = arith.constant 0 : index
    %159 = vector.load %arg6[%c1_91, %c0_92] : memref<28x96xf32, #tpu.memory_space<vmem>>, vector<12x96xf32>
    %160 = vector.broadcast %154 : vector<1x96xf32> to vector<12x96xf32>
    %161 = arith.mulf %160, %159 : vector<12x96xf32>
    %162 = arith.addf %158, %161 : vector<12x96xf32>
    %c2_93 = arith.constant 2 : index
    %c0_94 = arith.constant 0 : index
    %163 = vector.load %arg6[%c2_93, %c0_94] : memref<28x96xf32, #tpu.memory_space<vmem>>, vector<12x96xf32>
    %164 = vector.broadcast %155 : vector<1x96xf32> to vector<12x96xf32>
    %165 = arith.mulf %164, %163 : vector<12x96xf32>
    %166 = arith.addf %162, %165 : vector<12x96xf32>
    %c0_95 = arith.constant 0 : index
    %c0_96 = arith.constant 0 : index
    %167 = vector.load %arg7[%c0_95, %c0_96] : memref<24x96xf32, #tpu.memory_space<vmem>>, vector<12x96xf32>
    tpu.vector_store %arg7[%c0_95, %c0_96], %166 {strides = array<i32>} : memref<24x96xf32, #tpu.memory_space<vmem>>, vector<12x96xf32>,
    %c14_97 = arith.constant 14 : index
    %c0_98 = arith.constant 0 : index
    %168 = vector.load %arg6[%c14_97, %c0_98] : memref<28x96xf32, #tpu.memory_space<vmem>>, vector<12x96xf32>
    %169 = vector.broadcast %153 : vector<1x96xf32> to vector<12x96xf32>
    %170 = arith.mulf %169, %168 : vector<12x96xf32>
    %c15_99 = arith.constant 15 : index
    %c0_100 = arith.constant 0 : index
    %171 = vector.load %arg6[%c15_99, %c0_100] : memref<28x96xf32, #tpu.memory_space<vmem>>, vector<12x96xf32>
    %172 = vector.broadcast %154 : vector<1x96xf32> to vector<12x96xf32>
    %173 = arith.mulf %172, %171 : vector<12x96xf32>
    %174 = arith.addf %170, %173 : vector<12x96xf32>
    %c16_101 = arith.constant 16 : index
    %c0_102 = arith.constant 0 : index
    %175 = vector.load %arg6[%c16_101, %c0_102] : memref<28x96xf32, #tpu.memory_space<vmem>>, vector<12x96xf32>
    %176 = vector.broadcast %155 : vector<1x96xf32> to vector<12x96xf32>
    %177 = arith.mulf %176, %175 : vector<12x96xf32>
    %178 = arith.addf %174, %177 : vector<12x96xf32>
    %c12_103 = arith.constant 12 : index
    %c0_104 = arith.constant 0 : index
    %179 = vector.load %arg7[%c12_103, %c0_104] : memref<24x96xf32, #tpu.memory_space<vmem>>, vector<12x96xf32>
    tpu.vector_store %arg7[%c12_103, %c0_104], %178 {strides = array<i32>} : memref<24x96xf32, #tpu.memory_space<vmem>>, vector<12x96xf32>,
    %c0_105 = arith.constant 0 : index
    %c0_106 = arith.constant 0 : index
    %180 = vector.load %arg7[%c0_105, %c0_106] : memref<24x96xf32, #tpu.memory_space<vmem>>, vector<24x96xf32>
    %c272 = arith.constant 272 : index
    %c0_107 = arith.constant 0 : index
    %181 = vector.load %arg1[%c272, %c0_107] : memref<600x128xf32, #tpu.memory_space<vmem>>, vector<96x24xf32>
    %cst_108 = arith.constant dense<0.000000e+00> : vector<24x24xf32>
    %182 = tpu.matmul %180, %181, %cst_108 {dimension_numbers = #tpu.dot_dimension_numbers<[1], [0], [0], [1], [0, 0, 1, 1], [], []>} : vector<24x96xf32>, vector<96x24xf32>, vector<24x24xf32> -> vector<24x24xf32>
    %183 = vector.extract_strided_slice %182 {offsets = [0, 0], sizes = [1, 24], strides = [1, 1]} : vector<24x24xf32> to vector<1x24xf32>
    %184 = vector.extract_strided_slice %182 {offsets = [1, 0], sizes = [1, 24], strides = [1, 1]} : vector<24x24xf32> to vector<1x24xf32>
    %185 = arith.maximumf %183, %184 : vector<1x24xf32>
    %c0_109 = arith.constant 0 : index
    %c0_110 = arith.constant 0 : index
    %186 = vector.load %arg8[%c0_109, %c0_110] : memref<12x24xf32, #tpu.memory_space<vmem>>, vector<1x24xf32>
    tpu.vector_store %arg8[%c0_109, %c0_110], %185 {strides = array<i32>} : memref<12x24xf32, #tpu.memory_space<vmem>>, vector<1x24xf32>,
    %187 = vector.extract_strided_slice %182 {offsets = [2, 0], sizes = [1, 24], strides = [1, 1]} : vector<24x24xf32> to vector<1x24xf32>
    %188 = vector.extract_strided_slice %182 {offsets = [3, 0], sizes = [1, 24], strides = [1, 1]} : vector<24x24xf32> to vector<1x24xf32>
    %189 = arith.maximumf %187, %188 : vector<1x24xf32>
    %c1_111 = arith.constant 1 : index
    %c0_112 = arith.constant 0 : index
    %190 = vector.load %arg8[%c1_111, %c0_112] : memref<12x24xf32, #tpu.memory_space<vmem>>, vector<1x24xf32>
    tpu.vector_store %arg8[%c1_111, %c0_112], %189 {strides = array<i32>} : memref<12x24xf32, #tpu.memory_space<vmem>>, vector<1x24xf32>,
    %191 = vector.extract_strided_slice %182 {offsets = [4, 0], sizes = [1, 24], strides = [1, 1]} : vector<24x24xf32> to vector<1x24xf32>
    %192 = vector.extract_strided_slice %182 {offsets = [5, 0], sizes = [1, 24], strides = [1, 1]} : vector<24x24xf32> to vector<1x24xf32>
    %193 = arith.maximumf %191, %192 : vector<1x24xf32>
    %c2_113 = arith.constant 2 : index
    %c0_114 = arith.constant 0 : index
    %194 = vector.load %arg8[%c2_113, %c0_114] : memref<12x24xf32, #tpu.memory_space<vmem>>, vector<1x24xf32>
    tpu.vector_store %arg8[%c2_113, %c0_114], %193 {strides = array<i32>} : memref<12x24xf32, #tpu.memory_space<vmem>>, vector<1x24xf32>,
    %195 = vector.extract_strided_slice %182 {offsets = [6, 0], sizes = [1, 24], strides = [1, 1]} : vector<24x24xf32> to vector<1x24xf32>
    %196 = vector.extract_strided_slice %182 {offsets = [7, 0], sizes = [1, 24], strides = [1, 1]} : vector<24x24xf32> to vector<1x24xf32>
    %197 = arith.maximumf %195, %196 : vector<1x24xf32>
    %c3_115 = arith.constant 3 : index
    %c0_116 = arith.constant 0 : index
    %198 = vector.load %arg8[%c3_115, %c0_116] : memref<12x24xf32, #tpu.memory_space<vmem>>, vector<1x24xf32>
    tpu.vector_store %arg8[%c3_115, %c0_116], %197 {strides = array<i32>} : memref<12x24xf32, #tpu.memory_space<vmem>>, vector<1x24xf32>,
    %199 = vector.extract_strided_slice %182 {offsets = [8, 0], sizes = [1, 24], strides = [1, 1]} : vector<24x24xf32> to vector<1x24xf32>
    %200 = vector.extract_strided_slice %182 {offsets = [9, 0], sizes = [1, 24], strides = [1, 1]} : vector<24x24xf32> to vector<1x24xf32>
    %201 = arith.maximumf %199, %200 : vector<1x24xf32>
    %c4_117 = arith.constant 4 : index
    %c0_118 = arith.constant 0 : index
    %202 = vector.load %arg8[%c4_117, %c0_118] : memref<12x24xf32, #tpu.memory_space<vmem>>, vector<1x24xf32>
    tpu.vector_store %arg8[%c4_117, %c0_118], %201 {strides = array<i32>} : memref<12x24xf32, #tpu.memory_space<vmem>>, vector<1x24xf32>,
    %203 = vector.extract_strided_slice %182 {offsets = [10, 0], sizes = [1, 24], strides = [1, 1]} : vector<24x24xf32> to vector<1x24xf32>
    %204 = vector.extract_strided_slice %182 {offsets = [11, 0], sizes = [1, 24], strides = [1, 1]} : vector<24x24xf32> to vector<1x24xf32>
    %205 = arith.maximumf %203, %204 : vector<1x24xf32>
    %c5_119 = arith.constant 5 : index
    %c0_120 = arith.constant 0 : index
    %206 = vector.load %arg8[%c5_119, %c0_120] : memref<12x24xf32, #tpu.memory_space<vmem>>, vector<1x24xf32>
    tpu.vector_store %arg8[%c5_119, %c0_120], %205 {strides = array<i32>} : memref<12x24xf32, #tpu.memory_space<vmem>>, vector<1x24xf32>,
    %207 = vector.extract_strided_slice %182 {offsets = [12, 0], sizes = [1, 24], strides = [1, 1]} : vector<24x24xf32> to vector<1x24xf32>
    %208 = vector.extract_strided_slice %182 {offsets = [13, 0], sizes = [1, 24], strides = [1, 1]} : vector<24x24xf32> to vector<1x24xf32>
    %209 = arith.maximumf %207, %208 : vector<1x24xf32>
    %c6_121 = arith.constant 6 : index
    %c0_122 = arith.constant 0 : index
    %210 = vector.load %arg8[%c6_121, %c0_122] : memref<12x24xf32, #tpu.memory_space<vmem>>, vector<1x24xf32>
    tpu.vector_store %arg8[%c6_121, %c0_122], %209 {strides = array<i32>} : memref<12x24xf32, #tpu.memory_space<vmem>>, vector<1x24xf32>,
    %211 = vector.extract_strided_slice %182 {offsets = [14, 0], sizes = [1, 24], strides = [1, 1]} : vector<24x24xf32> to vector<1x24xf32>
    %212 = vector.extract_strided_slice %182 {offsets = [15, 0], sizes = [1, 24], strides = [1, 1]} : vector<24x24xf32> to vector<1x24xf32>
    %213 = arith.maximumf %211, %212 : vector<1x24xf32>
    %c7_123 = arith.constant 7 : index
    %c0_124 = arith.constant 0 : index
    %214 = vector.load %arg8[%c7_123, %c0_124] : memref<12x24xf32, #tpu.memory_space<vmem>>, vector<1x24xf32>
    tpu.vector_store %arg8[%c7_123, %c0_124], %213 {strides = array<i32>} : memref<12x24xf32, #tpu.memory_space<vmem>>, vector<1x24xf32>,
    %215 = vector.extract_strided_slice %182 {offsets = [16, 0], sizes = [1, 24], strides = [1, 1]} : vector<24x24xf32> to vector<1x24xf32>
    %216 = vector.extract_strided_slice %182 {offsets = [17, 0], sizes = [1, 24], strides = [1, 1]} : vector<24x24xf32> to vector<1x24xf32>
    %217 = arith.maximumf %215, %216 : vector<1x24xf32>
    %c8_125 = arith.constant 8 : index
    %c0_126 = arith.constant 0 : index
    %218 = vector.load %arg8[%c8_125, %c0_126] : memref<12x24xf32, #tpu.memory_space<vmem>>, vector<1x24xf32>
    tpu.vector_store %arg8[%c8_125, %c0_126], %217 {strides = array<i32>} : memref<12x24xf32, #tpu.memory_space<vmem>>, vector<1x24xf32>,
    %219 = vector.extract_strided_slice %182 {offsets = [18, 0], sizes = [1, 24], strides = [1, 1]} : vector<24x24xf32> to vector<1x24xf32>
    %220 = vector.extract_strided_slice %182 {offsets = [19, 0], sizes = [1, 24], strides = [1, 1]} : vector<24x24xf32> to vector<1x24xf32>
    %221 = arith.maximumf %219, %220 : vector<1x24xf32>
    %c9_127 = arith.constant 9 : index
    %c0_128 = arith.constant 0 : index
    %222 = vector.load %arg8[%c9_127, %c0_128] : memref<12x24xf32, #tpu.memory_space<vmem>>, vector<1x24xf32>
    tpu.vector_store %arg8[%c9_127, %c0_128], %221 {strides = array<i32>} : memref<12x24xf32, #tpu.memory_space<vmem>>, vector<1x24xf32>,
    %223 = vector.extract_strided_slice %182 {offsets = [20, 0], sizes = [1, 24], strides = [1, 1]} : vector<24x24xf32> to vector<1x24xf32>
    %224 = vector.extract_strided_slice %182 {offsets = [21, 0], sizes = [1, 24], strides = [1, 1]} : vector<24x24xf32> to vector<1x24xf32>
    %225 = arith.maximumf %223, %224 : vector<1x24xf32>
    %c10_129 = arith.constant 10 : index
    %c0_130 = arith.constant 0 : index
    %226 = vector.load %arg8[%c10_129, %c0_130] : memref<12x24xf32, #tpu.memory_space<vmem>>, vector<1x24xf32>
    tpu.vector_store %arg8[%c10_129, %c0_130], %225 {strides = array<i32>} : memref<12x24xf32, #tpu.memory_space<vmem>>, vector<1x24xf32>,
    %227 = vector.extract_strided_slice %182 {offsets = [22, 0], sizes = [1, 24], strides = [1, 1]} : vector<24x24xf32> to vector<1x24xf32>
    %228 = vector.extract_strided_slice %182 {offsets = [23, 0], sizes = [1, 24], strides = [1, 1]} : vector<24x24xf32> to vector<1x24xf32>
    %229 = arith.maximumf %227, %228 : vector<1x24xf32>
    %c11_131 = arith.constant 11 : index
    %c0_132 = arith.constant 0 : index
    %230 = vector.load %arg8[%c11_131, %c0_132] : memref<12x24xf32, #tpu.memory_space<vmem>>, vector<1x24xf32>
    tpu.vector_store %arg8[%c11_131, %c0_132], %229 {strides = array<i32>} : memref<12x24xf32, #tpu.memory_space<vmem>>, vector<1x24xf32>,
    %c0_133 = arith.constant 0 : index
    %c0_134 = arith.constant 0 : index
    %231 = vector.load %arg8[%c0_133, %c0_134] : memref<12x24xf32, #tpu.memory_space<vmem>>, vector<12x24xf32>
    %c368 = arith.constant 368 : index
    %c0_135 = arith.constant 0 : index
    %232 = vector.load %arg1[%c368, %c0_135] : memref<600x128xf32, #tpu.memory_space<vmem>>, vector<24x72xf32>
    %c392 = arith.constant 392 : index
    %c0_136 = arith.constant 0 : index
    %233 = vector.load %arg1[%c392, %c0_136] : memref<600x128xf32, #tpu.memory_space<vmem>>, vector<24x72xf32>
    %cst_137 = arith.constant dense<0.000000e+00> : vector<12x72xf32>
    %234 = tpu.matmul %231, %232, %cst_137 {dimension_numbers = #tpu.dot_dimension_numbers<[1], [0], [0], [1], [0, 0, 1, 1], [], []>} : vector<12x24xf32>, vector<24x72xf32>, vector<12x72xf32> -> vector<12x72xf32>
    %cst_138 = arith.constant dense<0.000000e+00> : vector<12x72xf32>
    %235 = tpu.matmul %231, %233, %cst_138 {dimension_numbers = #tpu.dot_dimension_numbers<[1], [0], [0], [1], [0, 0, 1, 1], [], []>} : vector<12x24xf32>, vector<24x72xf32>, vector<12x72xf32> -> vector<12x72xf32>
    %236 = arith.maximumf %234, %235 : vector<12x72xf32>
    %c416 = arith.constant 416 : index
    %c0_139 = arith.constant 0 : index
    %237 = vector.load %arg1[%c416, %c0_139] : memref<600x128xf32, #tpu.memory_space<vmem>>, vector<1x72xf32>
    %238 = vector.broadcast %237 : vector<1x72xf32> to vector<12x72xf32>
    %239 = arith.addf %236, %238 : vector<12x72xf32>
    %cst_140 = arith.constant 0.000000e+00 : f32
    %240 = vector.broadcast %cst_140 : f32 to vector<12x72xf32>
    %241 = arith.maximumf %239, %240 : vector<12x72xf32>
    %c424 = arith.constant 424 : index
    %c0_141 = arith.constant 0 : index
    %242 = vector.load %arg1[%c424, %c0_141] : memref<600x128xf32, #tpu.memory_space<vmem>>, vector<1x72xf32>
    %c425 = arith.constant 425 : index
    %c0_142 = arith.constant 0 : index
    %243 = vector.load %arg1[%c425, %c0_142] : memref<600x128xf32, #tpu.memory_space<vmem>>, vector<1x72xf32>
    %c426 = arith.constant 426 : index
    %c0_143 = arith.constant 0 : index
    %244 = vector.load %arg1[%c426, %c0_143] : memref<600x128xf32, #tpu.memory_space<vmem>>, vector<1x72xf32>
    %c427 = arith.constant 427 : index
    %c0_144 = arith.constant 0 : index
    %245 = vector.load %arg1[%c427, %c0_144] : memref<600x128xf32, #tpu.memory_space<vmem>>, vector<1x72xf32>
    %c428 = arith.constant 428 : index
    %c0_145 = arith.constant 0 : index
    %246 = vector.load %arg1[%c428, %c0_145] : memref<600x128xf32, #tpu.memory_space<vmem>>, vector<1x72xf32>
    %c429 = arith.constant 429 : index
    %c0_146 = arith.constant 0 : index
    %247 = vector.load %arg1[%c429, %c0_146] : memref<600x128xf32, #tpu.memory_space<vmem>>, vector<1x72xf32>
    %248 = vector.extract_strided_slice %241 {offsets = [0, 0], sizes = [1, 72], strides = [1, 1]} : vector<12x72xf32> to vector<1x72xf32>
    %249 = arith.mulf %242, %248 : vector<1x72xf32>
    %250 = vector.extract_strided_slice %241 {offsets = [1, 0], sizes = [1, 72], strides = [1, 1]} : vector<12x72xf32> to vector<1x72xf32>
    %251 = arith.mulf %243, %250 : vector<1x72xf32>
    %252 = arith.addf %249, %251 : vector<1x72xf32>
    %253 = vector.extract_strided_slice %241 {offsets = [2, 0], sizes = [1, 72], strides = [1, 1]} : vector<12x72xf32> to vector<1x72xf32>
    %254 = arith.mulf %244, %253 : vector<1x72xf32>
    %255 = arith.addf %252, %254 : vector<1x72xf32>
    %256 = vector.extract_strided_slice %241 {offsets = [3, 0], sizes = [1, 72], strides = [1, 1]} : vector<12x72xf32> to vector<1x72xf32>
    %257 = arith.mulf %245, %256 : vector<1x72xf32>
    %258 = arith.addf %255, %257 : vector<1x72xf32>
    %259 = vector.extract_strided_slice %241 {offsets = [4, 0], sizes = [1, 72], strides = [1, 1]} : vector<12x72xf32> to vector<1x72xf32>
    %260 = arith.mulf %246, %259 : vector<1x72xf32>
    %261 = arith.addf %258, %260 : vector<1x72xf32>
    %262 = vector.extract_strided_slice %241 {offsets = [5, 0], sizes = [1, 72], strides = [1, 1]} : vector<12x72xf32> to vector<1x72xf32>
    %263 = arith.mulf %247, %262 : vector<1x72xf32>
    %264 = arith.addf %261, %263 : vector<1x72xf32>
    %c0_147 = arith.constant 0 : index
    %c0_148 = arith.constant 0 : index
    %265 = vector.load %arg9[%c0_147, %c0_148] : memref<2x72xf32, #tpu.memory_space<vmem>>, vector<1x72xf32>
    tpu.vector_store %arg9[%c0_147, %c0_148], %264 {strides = array<i32>} : memref<2x72xf32, #tpu.memory_space<vmem>>, vector<1x72xf32>,
    %266 = vector.extract_strided_slice %241 {offsets = [6, 0], sizes = [1, 72], strides = [1, 1]} : vector<12x72xf32> to vector<1x72xf32>
    %267 = arith.mulf %242, %266 : vector<1x72xf32>
    %268 = vector.extract_strided_slice %241 {offsets = [7, 0], sizes = [1, 72], strides = [1, 1]} : vector<12x72xf32> to vector<1x72xf32>
    %269 = arith.mulf %243, %268 : vector<1x72xf32>
    %270 = arith.addf %267, %269 : vector<1x72xf32>
    %271 = vector.extract_strided_slice %241 {offsets = [8, 0], sizes = [1, 72], strides = [1, 1]} : vector<12x72xf32> to vector<1x72xf32>
    %272 = arith.mulf %244, %271 : vector<1x72xf32>
    %273 = arith.addf %270, %272 : vector<1x72xf32>
    %274 = vector.extract_strided_slice %241 {offsets = [9, 0], sizes = [1, 72], strides = [1, 1]} : vector<12x72xf32> to vector<1x72xf32>
    %275 = arith.mulf %245, %274 : vector<1x72xf32>
    %276 = arith.addf %273, %275 : vector<1x72xf32>
    %277 = vector.extract_strided_slice %241 {offsets = [10, 0], sizes = [1, 72], strides = [1, 1]} : vector<12x72xf32> to vector<1x72xf32>
    %278 = arith.mulf %246, %277 : vector<1x72xf32>
    %279 = arith.addf %276, %278 : vector<1x72xf32>
    %280 = vector.extract_strided_slice %241 {offsets = [11, 0], sizes = [1, 72], strides = [1, 1]} : vector<12x72xf32> to vector<1x72xf32>
    %281 = arith.mulf %247, %280 : vector<1x72xf32>
    %282 = arith.addf %279, %281 : vector<1x72xf32>
    %c1_149 = arith.constant 1 : index
    %c0_150 = arith.constant 0 : index
    %283 = vector.load %arg9[%c1_149, %c0_150] : memref<2x72xf32, #tpu.memory_space<vmem>>, vector<1x72xf32>
    tpu.vector_store %arg9[%c1_149, %c0_150], %282 {strides = array<i32>} : memref<2x72xf32, #tpu.memory_space<vmem>>, vector<1x72xf32>,
    %c0_151 = arith.constant 0 : index
    %c0_152 = arith.constant 0 : index
    %284 = vector.load %arg9[%c0_151, %c0_152] : memref<2x72xf32, #tpu.memory_space<vmem>>, vector<2x72xf32>
    %c432 = arith.constant 432 : index
    %c0_153 = arith.constant 0 : index
    %285 = vector.load %arg1[%c432, %c0_153] : memref<600x128xf32, #tpu.memory_space<vmem>>, vector<72x36xf32>
    %cst_154 = arith.constant dense<0.000000e+00> : vector<2x36xf32>
    %286 = tpu.matmul %284, %285, %cst_154 {dimension_numbers = #tpu.dot_dimension_numbers<[1], [0], [0], [1], [0, 0, 1, 1], [], []>} : vector<2x72xf32>, vector<72x36xf32>, vector<2x36xf32> -> vector<2x36xf32>
    %c504 = arith.constant 504 : index
    %c0_155 = arith.constant 0 : index
    %287 = vector.load %arg1[%c504, %c0_155] : memref<600x128xf32, #tpu.memory_space<vmem>>, vector<1x36xf32>
    %288 = vector.broadcast %287 : vector<1x36xf32> to vector<2x36xf32>
    %289 = arith.addf %286, %288 : vector<2x36xf32>
    %cst_156 = arith.constant 0.000000e+00 : f32
    %290 = vector.broadcast %cst_156 : f32 to vector<2x36xf32>
    %291 = arith.maximumf %289, %290 : vector<2x36xf32>
    %c512 = arith.constant 512 : index
    %c0_157 = arith.constant 0 : index
    %292 = vector.load %arg1[%c512, %c0_157] : memref<600x128xf32, #tpu.memory_space<vmem>>, vector<36x30xf32>
    %cst_158 = arith.constant dense<0.000000e+00> : vector<2x30xf32>
    %293 = tpu.matmul %291, %292, %cst_158 {dimension_numbers = #tpu.dot_dimension_numbers<[1], [0], [0], [1], [0, 0, 1, 1], [], []>} : vector<2x36xf32>, vector<36x30xf32>, vector<2x30xf32> -> vector<2x30xf32>
    %c552 = arith.constant 552 : index
    %c0_159 = arith.constant 0 : index
    %294 = vector.load %arg1[%c552, %c0_159] : memref<600x128xf32, #tpu.memory_space<vmem>>, vector<1x30xf32>
    %295 = vector.broadcast %294 : vector<1x30xf32> to vector<2x30xf32>
    %296 = arith.addf %293, %295 : vector<2x30xf32>
    %cst_160 = arith.constant 0.000000e+00 : f32
    %297 = vector.broadcast %cst_160 : f32 to vector<2x30xf32>
    %298 = arith.maximumf %296, %297 : vector<2x30xf32>
    %c560 = arith.constant 560 : index
    %c0_161 = arith.constant 0 : index
    %299 = vector.load %arg1[%c560, %c0_161] : memref<600x128xf32, #tpu.memory_space<vmem>>, vector<30x10xf32>
    %cst_162 = arith.constant dense<0.000000e+00> : vector<2x10xf32>
    %300 = tpu.matmul %298, %299, %cst_162 {dimension_numbers = #tpu.dot_dimension_numbers<[1], [0], [0], [1], [0, 0, 1, 1], [], []>} : vector<2x30xf32>, vector<30x10xf32>, vector<2x10xf32> -> vector<2x10xf32>
    %c592 = arith.constant 592 : index
    %c0_163 = arith.constant 0 : index
    %301 = vector.load %arg1[%c592, %c0_163] : memref<600x128xf32, #tpu.memory_space<vmem>>, vector<1x10xf32>
    %302 = vector.broadcast %301 : vector<1x10xf32> to vector<2x10xf32>
    %303 = arith.addf %300, %302 : vector<2x10xf32>
    %c0_164 = arith.constant 0 : index
    %c0_165 = arith.constant 0 : index
    %304 = vector.load %arg2[%c0_164, %c0_165] : memref<2x10xf32, #tpu.memory_space<vmem>>, vector<2x10xf32>
    tpu.vector_store %arg2[%c0_164, %c0_165], %303 {strides = array<i32>} : memref<2x10xf32, #tpu.memory_space<vmem>>, vector<2x10xf32>,
    return
  }
}

</mosaic_0001>

<llo_original>
// kernel: net5_forward.1
$region0: #{net5_forward.1}
  #allocation0 [shape = 'u32[]', space=smem, size = 0x4, offset = 0x4, fixed_abs, tag = 'smem constant byte address 0x4 - core index']
  #allocation1 [shape = 'u32[144,128]{1,0:T(1,128)}', space=vmem, size = 0x12000, scoped, tag = 'internal scratch']
  #allocation2 [shape = 'f32[44,96]{1,0:T(8,128)}', space=vmem, size = 0x6000, scoped, tag = 'scratch operand']
  #allocation3 [shape = 'f32[34,96]{1,0:T(8,128)}', space=vmem, size = 0x5000, scoped, tag = 'scratch operand']
  #allocation4 [shape = 'f32[16,68]{1,0:T(8,128)}', space=vmem, size = 0x2000, scoped, tag = 'scratch operand']
  #allocation5 [shape = 'f32[28,96]{1,0:T(8,128)}', space=vmem, size = 0x4000, scoped, tag = 'scratch operand']
  #allocation6 [shape = 'f32[24,96]{1,0:T(8,128)}', space=vmem, size = 0x3000, scoped, tag = 'scratch operand']
  #allocation7 [shape = 'f32[12,24]{1,0:T(8,128)}', space=vmem, size = 0x2000, scoped, tag = 'scratch operand']
  #allocation8 [shape = 'f32[2,72]{1,0:T(2,128)}', space=vmem, size = 0x400, scoped, tag = 'scratch operand']
  %s0 = inlined_call_operand.hbm [shape: f32[32,16], index: 0, kind: input, shape index: {}]
  %s1 = inlined_call_operand.hbm [shape: f32[600,128], index: 1, kind: input, shape index: {}]
  %s2 = inlined_call_operand.hbm [shape: f32[2,10], index: 2, kind: output, shape index: {}]
  %s3 = sld [smem:[#allocation0]]
  $region26: #{net5_forward.1} parent=0
    _
  %s5 = ssub.s32 1, %s3
  %s6 = scalar_select 0, %s5, %s3
  $region1: #{net5_forward.1} parent=0
    #allocation9 [shape = 'u8[16384]{0}', space=vmem, size = 0x4000, scoped, tag = 'input window, operand 0, single buffered']
    #allocation10 [shape = 's32[1]{0}', space=sflag, size = 0x4, scoped, tag = 'scoped memory for net5_forward.1']
    #allocation11 [shape = 's32[1]{0}', space=sflag, size = 0x4, scoped, tag = 'scoped memory for net5_forward.1']
    #allocation12 [shape = 'u8[307200]{0}', space=vmem, size = 0x4b000, scoped, tag = 'input window, operand 1, single buffered']
    #allocation13 [shape = 's32[1]{0}', space=sflag, size = 0x4, scoped, tag = 'scoped memory for net5_forward.1']
    #allocation14 [shape = 'u8[1024]{0}', space=vmem, size = 0x400, scoped, tag = 'output window, operand 0, single buffered']
    %7 = vsyncpa [#allocation10], 0
    %8 = vsyncpa [#allocation13], 0
    %9 = vsyncpa [#allocation11], 0
    // Predicated region
    $region2: #{net5_forward.1} parent=1 // pred_check
      _
    $region3: #{net5_forward.1} parent=1 // pred_check_branch
      %11 = sbr.rel (0) target = $region5
    $region4: #{net5_forward.1} parent=1 // pred_region
      %s13 = ssub.s32 512, 512
      %14 = vsyncadd [#allocation10], %s13
      %s15 = sshll.u32 [#allocation9], 4
      %s16 = int_to_ptr.vmem [resolvable:$true] %s15
      %21 = dma.hbm_to_vmem [thread:$0]  %s0, 512, %s16, [#allocation10], 128, 128, 8
    $region5: #{net5_forward.1} parent=1 // pred_fallthru
      _
    // Predicated region
    $region6: #{net5_forward.1} parent=1 // pred_check
      _
    $region7: #{net5_forward.1} parent=1 // pred_check_branch
      %23 = sbr.rel (0) target = $region9
    $region8: #{net5_forward.1} parent=1 // pred_region
      %s25 = ssub.s32 9600, 9600
      %26 = vsyncadd [#allocation13], %s25
      %s27 = sshll.u32 [#allocation12], 4
      %s28 = int_to_ptr.vmem [resolvable:$true] %s27
      %33 = dma.hbm_to_vmem [thread:$0]  %s1, 9600, %s28, [#allocation13], 128, 128, 8
    $region9: #{net5_forward.1} parent=1 // pred_fallthru
      _
    // Predicated region
    $region10: #{net5_forward.1} parent=1 // pred_check
      _
    $region11: #{net5_forward.1} parent=1 // pred_check_branch
      %35 = sbr.rel (0) target = $region13
    $region12: #{net5_forward.1} parent=1 // pred_region
      %36 = dma.done [#allocation10], 512
    $region13: #{net5_forward.1} parent=1 // pred_fallthru
      _
    // Predicated region
    $region14: #{net5_forward.1} parent=1 // pred_check
      _
    $region15: #{net5_forward.1} parent=1 // pred_check_branch
      %38 = sbr.rel (0) target = $region17
    $region16: #{net5_forward.1} parent=1 // pred_region
      %39 = dma.done [#allocation13], 9600
    $region17: #{net5_forward.1} parent=1 // pred_fallthru
      _
    %v40 = vld [vmem:[#allocation9] sm:$0xff]
    %v41 = vld [vmem:[#allocation9 + $0x8] sm:$0xff]
    %v42 = vld [vmem:[#allocation9 + $0x10] sm:$0xff]
    %v43 = vld [vmem:[#allocation9 + $0x18] sm:$0xff]
    %v44 = vld [vmem:[#allocation12] sm:$0xff]
    %v45 = vld [vmem:[#allocation12 + $0x8] sm:$0xff]
    %vm46 = vcmask 130048
    %v48 = vsel %vm46, %v40, 0
    %v51 = vsel %vm46, %v41, 0
    %v54 = vsel %vm46, %v42, 0
    %v57 = vsel %vm46, %v43, 0
    %59 = vmatprep.subr.mxu0 0.0
    %60 = vmatpush1.msra.mxu0 %v44
    %61 = vmatprep.subr.mxu0 0.0
    %62 = vmatpush1.msra.mxu0 %v45
    %63 = vmatprep.subr.mxu0 0.0
    %64 = vmatpush1.msra.mxu0 0.0
    %65 = vmatprep.subr.mxu0 0.0
    %66 = vmatpush1.msra.mxu0 0.0
    %67 = vmatprep.subr.mxu0 0.0
    %68 = vmatpush1.msra.mxu0 0.0
    %69 = vmatprep.subr.mxu0 0.0
    %70 = vmatpush1.msra.mxu0 0.0
    %71 = vmatprep.subr.mxu0 0.0
    %72 = vmatpush1.msra.mxu0 0.0
    %73 = vmatprep.subr.mxu0 0.0
    %74 = vmatpush1.msra.mxu0 0.0
    %75 = vmatprep.subr.mxu0 0.0
    %76 = vmatpush1.msra.mxu0 0.0
    %77 = vmatprep.subr.mxu0 0.0
    %78 = vmatpush1.msra.mxu0 0.0
    %79 = vmatprep.subr.mxu0 0.0
    %80 = vmatpush1.msra.mxu0 0.0
    %81 = vmatprep.subr.mxu0 0.0
    %82 = vmatpush1.msra.mxu0 0.0
    %83 = vmatprep.subr.mxu0 0.0
    %84 = vmatpush1.msra.mxu0 0.0
    %85 = vmatprep.subr.mxu0 0.0
    %86 = vmatpush1.msra.mxu0 0.0
    %87 = vmatprep.subr.mxu0 0.0
    %88 = vmatpush1.msra.mxu0 0.0
    %89 = vmatprep.subr.mxu0 0.0
    %90 = vmatpush1.msra.mxu0 0.0
    %91 = vmatprep.subr.mxu0 0.0
    %92 = vmatpush1.msra.mxu0 0.0
    %93 = vmatprep.subr.mxu0 0.0
    %94 = vmatpush1.msra.mxu0 0.0
    %95 = vmatprep.subr.mxu0 0.0
    %96 = vmatpush1.msra.mxu0 0.0
    %97 = vmatprep.subr.mxu0 0.0
    %98 = vmatpush1.msra.mxu0 0.0
    %99 = vmatprep.subr.mxu0 0.0
    %100 = vmatpush1.msra.mxu0 0.0
    %101 = vmatprep.subr.mxu0 0.0
    %102 = vmatpush1.msra.mxu0 0.0
    %103 = vmatprep.subr.mxu0 0.0
    %104 = vmatpush1.msra.mxu0 0.0
    %105 = vmatprep.subr.mxu0 0.0
    %106 = vmatpush1.msra.mxu0 0.0
    %107 = vmatprep.subr.mxu0 0.0
    %108 = vmatpush1.msra.mxu0 0.0
    %109 = vmatprep.subr.mxu0 0.0
    %110 = vmatpush1.msra.mxu0 0.0
    %111 = vmatprep.subr.mxu0 0.0
    %112 = vmatpush1.msra.mxu0 0.0
    %113 = vmatprep.subr.mxu0 0.0
    %114 = vmatpush1.msra.mxu0 0.0
    %115 = vmatprep.subr.mxu0 0.0
    %116 = vmatpush1.msra.mxu0 0.0
    %117 = vmatprep.subr.mxu0 0.0
    %118 = vmatpush1.msra.mxu0 0.0
    %119 = vmatprep.subr.mxu0 0.0
    %120 = vmatpush1.msra.mxu0 0.0
    %121 = vmatprep.subr.mxu0 0.0
    %122 = vmatpush1.msra.mxu0 0.0
    %123 = vmatprep.mubr.f32.mxu0 0.0
    %124 = vmatmul.mubr.f32.gmra.mrb[0].mxu0 %v48
    %v125 = vpop.f32.mrb[0].mxu0
    %v126 = vadd.f32 0.0, %v125
    %v127 = vpop.f32.mrb[0].mxu0
    %128 = vmatprep.mubr.f32.mxu0 0.0
    %129 = vmatmul.mubr.f32.gmra.mrb[0].mxu0 %v51
    %v130 = vpop.f32.mrb[0].mxu0
    %v131 = vadd.f32 0.0, %v130
    %v132 = vpop.f32.mrb[0].mxu0
    %133 = vmatprep.mubr.f32.mxu0 0.0
    %134 = vmatmul.mubr.f32.gmra.mrb[0].mxu0 %v54
    %v135 = vpop.f32.mrb[0].mxu0
    %v136 = vadd.f32 0.0, %v135
    %v137 = vpop.f32.mrb[0].mxu0
    %138 = vmatprep.mubr.f32.mxu0 0.0
    %139 = vmatmul.mubr.f32.gmra.mrb[0].mxu0 %v57
    %v140 = vpop.f32.mrb[0].mxu0
    %v141 = vadd.f32 0.0, %v140
    %v142 = vpop.f32.mrb[0].mxu0
    %143 = vdwg.mxu0
    %vm144 = vcmask 780288
    %145 = vst.msk [vmem:[#allocation2] sm:$0x7] %vm144, 0.0
    %vm146 = vcmask 785408
    %147 = vst.msk [vmem:[#allocation2 + $0x3] sm:$0xff] %vm146, %v126
    %148 = vst.msk [vmem:[#allocation2 + $0xb] sm:$0xff] %vm146, %v131
    %149 = vst.msk [vmem:[#allocation2 + $0x13] sm:$0x7] %vm144, 0.0
    %150 = vst.msk [vmem:[#allocation2 + $0x16] sm:$0x7] %vm144, 0.0
    %151 = vst.msk [vmem:[#allocation2 + $0x19] sm:$0xff] %vm146, %v136
    %152 = vst.msk [vmem:[#allocation2 + $0x21] sm:$0xff] %vm146, %v141
    %153 = vst.msk [vmem:[#allocation2 + $0x29] sm:$0x7] %vm144, 0.0
    %v154 = vld [vmem:[#allocation12 + $0x10] sm:$0x1]
    %v155 = vld [vmem:[#allocation12 + $0x11] sm:$0x1]
    %v156 = vld [vmem:[#allocation12 + $0x12] sm:$0x1]
    %v157 = vld [vmem:[#allocation12 + $0x13] sm:$0x1]
    %v158 = vld [vmem:[#allocation12 + $0x14] sm:$0x1]
    %v159 = vld [vmem:[#allocation12 + $0x15] sm:$0x1]
    %v160 = vld [vmem:[#allocation2] sm:$0xff]
    %v161 = vld [vmem:[#allocation2 + $0x8] sm:$0xff]
    %v162 = vld [vmem:[#allocation2 + $0x10] sm:$0x1]
    %v163 = vlaneseq
    %v164 = vshrl.u32 %v163, 7
    %v165 = vsub.s32 0, %v164
    %v166 = vrot.slane %v154, %v165
    %v167 = vmul.f32 %v166, %v160
    %v168 = vmul.f32 %v166, %v161
    %v169 = vmul.f32 %v166, %v162
    %v170 = vld [vmem:[#allocation2 + $0x1] sm:$0xff]
    %v171 = vld [vmem:[#allocation2 + $0x9] sm:$0xff]
    %v172 = vld [vmem:[#allocation2 + $0x11] sm:$0x1]
    %v173 = vlaneseq
    %v174 = vshrl.u32 %v173, 7
    %v175 = vsub.s32 0, %v174
    %v176 = vrot.slane %v155, %v175
    %v177 = vmul.f32 %v176, %v170
    %v178 = vmul.f32 %v176, %v171
    %v179 = vmul.f32 %v176, %v172
    %v180 = vadd.f32 %v167, %v177
    %v181 = vadd.f32 %v168, %v178
    %v182 = vadd.f32 %v169, %v179
    %v183 = vld [vmem:[#allocation2 + $0x2] sm:$0xff]
    %v184 = vld [vmem:[#allocation2 + $0xa] sm:$0xff]
    %v185 = vld [vmem:[#allocation2 + $0x12] sm:$0x1]
    %v186 = vlaneseq
    %v187 = vshrl.u32 %v186, 7
    %v188 = vsub.s32 0, %v187
    %v189 = vrot.slane %v156, %v188
    %v190 = vmul.f32 %v189, %v183
    %v191 = vmul.f32 %v189, %v184
    %v192 = vmul.f32 %v189, %v185
    %v193 = vadd.f32 %v180, %v190
    %v194 = vadd.f32 %v181, %v191
    %v195 = vadd.f32 %v182, %v192
    %v196 = vld [vmem:[#allocation2 + $0x3] sm:$0xff]
    %v197 = vld [vmem:[#allocation2 + $0xb] sm:$0xff]
    %v198 = vld [vmem:[#allocation2 + $0x13] sm:$0x1]
    %v199 = vlaneseq
    %v200 = vshrl.u32 %v199, 7
    %v201 = vsub.s32 0, %v200
    %v202 = vrot.slane %v157, %v201
    %v203 = vmul.f32 %v202, %v196
    %v204 = vmul.f32 %v202, %v197
    %v205 = vmul.f32 %v202, %v198
    %v206 = vadd.f32 %v193, %v203
    %v207 = vadd.f32 %v194, %v204
    %v208 = vadd.f32 %v195, %v205
    %v209 = vld [vmem:[#allocation2 + $0x4] sm:$0xff]
    %v210 = vld [vmem:[#allocation2 + $0xc] sm:$0xff]
    %v211 = vld [vmem:[#allocation2 + $0x14] sm:$0x1]
    %v212 = vlaneseq
    %v213 = vshrl.u32 %v212, 7
    %v214 = vsub.s32 0, %v213
    %v215 = vrot.slane %v158, %v214
    %v216 = vmul.f32 %v215, %v209
    %v217 = vmul.f32 %v215, %v210
    %v218 = vmul.f32 %v215, %v211
    %v219 = vadd.f32 %v206, %v216
    %v220 = vadd.f32 %v207, %v217
    %v221 = vadd.f32 %v208, %v218
    %v222 = vld [vmem:[#allocation2 + $0x5] sm:$0xff]
    %v223 = vld [vmem:[#allocation2 + $0xd] sm:$0xff]
    %v224 = vld [vmem:[#allocation2 + $0x15] sm:$0x1]
    %v225 = vlaneseq
    %v226 = vshrl.u32 %v225, 7
    %v227 = vsub.s32 0, %v226
    %v228 = vrot.slane %v159, %v227
    %v229 = vmul.f32 %v228, %v222
    %v230 = vmul.f32 %v228, %v223
    %v231 = vmul.f32 %v228, %v224
    %v232 = vadd.f32 %v219, %v229
    %v233 = vadd.f32 %v220, %v230
    %v234 = vadd.f32 %v221, %v231
    %235 = vst.msk [vmem:[#allocation3] sm:$0xff] %vm146, %v232
    %236 = vst.msk [vmem:[#allocation3 + $0x8] sm:$0xff] %vm146, %v233
    %vm237 = vcmask 778240
    %238 = vst.msk [vmem:[#allocation3 + $0x10] sm:$0x1] %vm237, %v234
    %v239 = vld [vmem:[#allocation2 + $0x16] sm:$0xff]
    %v240 = vld [vmem:[#allocation2 + $0x1e] sm:$0xff]
    %v241 = vld [vmem:[#allocation2 + $0x26] sm:$0x1]
    %v242 = vmul.f32 %v166, %v239
    %v243 = vmul.f32 %v166, %v240
    %v244 = vmul.f32 %v166, %v241
    %v245 = vld [vmem:[#allocation2 + $0x17] sm:$0xff]
    %v246 = vld [vmem:[#allocation2 + $0x1f] sm:$0xff]
    %v247 = vld [vmem:[#allocation2 + $0x27] sm:$0x1]
    %v248 = vmul.f32 %v176, %v245
    %v249 = vmul.f32 %v176, %v246
    %v250 = vmul.f32 %v176, %v247
    %v251 = vadd.f32 %v242, %v248
    %v252 = vadd.f32 %v243, %v249
    %v253 = vadd.f32 %v244, %v250
    %v254 = vld [vmem:[#allocation2 + $0x18] sm:$0xff]
    %v255 = vld [vmem:[#allocation2 + $0x20] sm:$0xff]
    %v256 = vld [vmem:[#allocation2 + $0x28] sm:$0x1]
    %v257 = vmul.f32 %v189, %v254
    %v258 = vmul.f32 %v189, %v255
    %v259 = vmul.f32 %v189, %v256
    %v260 = vadd.f32 %v251, %v257
    %v261 = vadd.f32 %v252, %v258
    %v262 = vadd.f32 %v253, %v259
    %v263 = vld [vmem:[#allocation2 + $0x19] sm:$0xff]
    %v264 = vld [vmem:[#allocation2 + $0x21] sm:$0xff]
    %v265 = vld [vmem:[#allocation2 + $0x29] sm:$0x1]
    %v266 = vmul.f32 %v202, %v263
    %v267 = vmul.f32 %v202, %v264
    %v268 = vmul.f32 %v202, %v265
    %v269 = vadd.f32 %v260, %v266
    %v270 = vadd.f32 %v261, %v267
    %v271 = vadd.f32 %v262, %v268
    %v272 = vld [vmem:[#allocation2 + $0x1a] sm:$0xff]
    %v273 = vld [vmem:[#allocation2 + $0x22] sm:$0xff]
    %v274 = vld [vmem:[#allocation2 + $0x2a] sm:$0x1]
    %v275 = vmul.f32 %v215, %v272
    %v276 = vmul.f32 %v215, %v273
    %v277 = vmul.f32 %v215, %v274
    %v278 = vadd.f32 %v269, %v275
    %v279 = vadd.f32 %v270, %v276
    %v280 = vadd.f32 %v271, %v277
    %v281 = vld [vmem:[#allocation2 + $0x1b] sm:$0xff]
    %v282 = vld [vmem:[#allocation2 + $0x23] sm:$0xff]
    %v283 = vld [vmem:[#allocation2 + $0x2b] sm:$0x1]
    %v284 = vmul.f32 %v228, %v281
    %v285 = vmul.f32 %v228, %v282
    %v286 = vmul.f32 %v228, %v283
    %v287 = vadd.f32 %v278, %v284
    %v288 = vadd.f32 %v279, %v285
    %v289 = vadd.f32 %v280, %v286
    %290 = vst.msk [vmem:[#allocation3 + $0x11] sm:$0xff] %vm146, %v287
    %291 = vst.msk [vmem:[#allocation3 + $0x19] sm:$0xff] %vm146, %v288
    %292 = vst.msk [vmem:[#allocation3 + $0x21] sm:$0x1] %vm237, %v289
    %v293 = vld [vmem:[#allocation3] sm:$0xff]
    %v294 = vld [vmem:[#allocation3 + $0x8] sm:$0xff]
    %v295 = vld [vmem:[#allocation3 + $0x10] sm:$0xff]
    %v296 = vld [vmem:[#allocation3 + $0x18] sm:$0xff]
    %v297 = vld [vmem:[#allocation3 + $0x20] sm:$0x3]
    %v298 = vld [vmem:[#allocation12 + $0x18] sm:$0xff]
    %v299 = vld [vmem:[#allocation12 + $0x20] sm:$0xff]
    %v300 = vld [vmem:[#allocation12 + $0x28] sm:$0xff]
    %v301 = vld [vmem:[#allocation12 + $0x30] sm:$0xff]
    %v302 = vld [vmem:[#allocation12 + $0x38] sm:$0xff]
    %v303 = vld [vmem:[#allocation12 + $0x40] sm:$0xff]
    %v304 = vld [vmem:[#allocation12 + $0x48] sm:$0xff]
    %v305 = vld [vmem:[#allocation12 + $0x50] sm:$0xff]
    %v306 = vld [vmem:[#allocation12 + $0x58] sm:$0xff]
    %v307 = vld [vmem:[#allocation12 + $0x60] sm:$0xff]
    %v308 = vld [vmem:[#allocation12 + $0x68] sm:$0xff]
    %v309 = vld [vmem:[#allocation12 + $0x70] sm:$0xff]
    %v311 = vsel %vm146, %v293, 0
    %v314 = vsel %vm146, %v294, 0
    %v317 = vsel %vm146, %v295, 0
    %v320 = vsel %vm146, %v296, 0
    %v323 = vsel %vm146, %v297, 0
    %325 = vmatprep.subr.mxu0 0.0
    %326 = vmatpush1.msra.mxu0 %v298
    %327 = vmatprep.subr.mxu0 0.0
    %328 = vmatpush1.msra.mxu0 %v299
    %329 = vmatprep.subr.mxu0 0.0
    %330 = vmatpush1.msra.mxu0 %v300
    %331 = vmatprep.subr.mxu0 0.0
    %332 = vmatpush1.msra.mxu0 %v301
    %333 = vmatprep.subr.mxu0 0.0
    %334 = vmatpush1.msra.mxu0 %v302
    %335 = vmatprep.subr.mxu0 0.0
    %336 = vmatpush1.msra.mxu0 %v303
    %337 = vmatprep.subr.mxu0 0.0
    %338 = vmatpush1.msra.mxu0 %v304
    %339 = vmatprep.subr.mxu0 0.0
    %340 = vmatpush1.msra.mxu0 %v305
    %341 = vmatprep.subr.mxu0 0.0
    %342 = vmatpush1.msra.mxu0 %v306
    %343 = vmatprep.subr.mxu0 0.0
    %344 = vmatpush1.msra.mxu0 %v307
    %345 = vmatprep.subr.mxu0 0.0
    %346 = vmatpush1.msra.mxu0 %v308
    %347 = vmatprep.subr.mxu0 0.0
    %348 = vmatpush1.msra.mxu0 %v309
    %349 = vmatprep.subr.mxu0 0.0
    %350 = vmatpush1.msra.mxu0 0.0
    %351 = vmatprep.subr.mxu0 0.0
    %352 = vmatpush1.msra.mxu0 0.0
    %353 = vmatprep.subr.mxu0 0.0
    %354 = vmatpush1.msra.mxu0 0.0
    %355 = vmatprep.subr.mxu0 0.0
    %356 = vmatpush1.msra.mxu0 0.0
    %357 = vmatprep.subr.mxu0 0.0
    %358 = vmatpush1.msra.mxu0 0.0
    %359 = vmatprep.subr.mxu0 0.0
    %360 = vmatpush1.msra.mxu0 0.0
    %361 = vmatprep.subr.mxu0 0.0
    %362 = vmatpush1.msra.mxu0 0.0
    %363 = vmatprep.subr.mxu0 0.0
    %364 = vmatpush1.msra.mxu0 0.0
    %365 = vmatprep.subr.mxu0 0.0
    %366 = vmatpush1.msra.mxu0 0.0
    %367 = vmatprep.subr.mxu0 0.0
    %368 = vmatpush1.msra.mxu0 0.0
    %369 = vmatprep.subr.mxu0 0.0
    %370 = vmatpush1.msra.mxu0 0.0
    %371 = vmatprep.subr.mxu0 0.0
    %372 = vmatpush1.msra.mxu0 0.0
    %373 = vmatprep.subr.mxu0 0.0
    %374 = vmatpush1.msra.mxu0 0.0
    %375 = vmatprep.subr.mxu0 0.0
    %376 = vmatpush1.msra.mxu0 0.0
    %377 = vmatprep.subr.mxu0 0.0
    %378 = vmatpush1.msra.mxu0 0.0
    %379 = vmatprep.subr.mxu0 0.0
    %380 = vmatpush1.msra.mxu0 0.0
    %381 = vmatprep.subr.mxu0 0.0
    %382 = vmatpush1.msra.mxu0 0.0
    %383 = vmatprep.subr.mxu0 0.0
    %384 = vmatpush1.msra.mxu0 0.0
    %385 = vmatprep.subr.mxu0 0.0
    %386 = vmatpush1.msra.mxu0 0.0
    %387 = vmatprep.subr.mxu0 0.0
    %388 = vmatpush1.msra.mxu0 0.0
    %389 = vmatprep.mubr.f32.mxu0 0.0
    %390 = vmatmul.mubr.f32.gmra.mrb[0].mxu0 %v311
    %v391 = vpop.f32.mrb[0].mxu0
    %v392 = vadd.f32 0.0, %v391
    %v393 = vpop.f32.mrb[0].mxu0
    %394 = vmatprep.mubr.f32.mxu0 0.0
    %395 = vmatmul.mubr.f32.gmra.mrb[0].mxu0 %v314
    %v396 = vpop.f32.mrb[0].mxu0
    %v397 = vadd.f32 0.0, %v396
    %v398 = vpop.f32.mrb[0].mxu0
    %399 = vmatprep.mubr.f32.mxu0 0.0
    %400 = vmatmul.mubr.f32.gmra.mrb[0].mxu0 %v317
    %v401 = vpop.f32.mrb[0].mxu0
    %v402 = vadd.f32 0.0, %v401
    %v403 = vpop.f32.mrb[0].mxu0
    %404 = vmatprep.mubr.f32.mxu0 0.0
    %405 = vmatmul.mubr.f32.gmra.mrb[0].mxu0 %v320
    %v406 = vpop.f32.mrb[0].mxu0
    %v407 = vadd.f32 0.0, %v406
    %v408 = vpop.f32.mrb[0].mxu0
    %409 = vmatprep.mubr.f32.mxu0 0.0
    %410 = vmatmul.mubr.f32.gmra.mrb[0].mxu0 %v323
    %v411 = vpop.f32.mrb[0].mxu0
    %v412 = vadd.f32 0.0, %v411
    %v413 = vpop.f32.mrb[0].mxu0
    %414 = vdwg.mxu0
    %v416 = vrot.slane %v392, 1
    %v418 = vmax.f32 %v392, %v416
    %vm419 = vcmask 548864
    %420 = vst.msk [vmem:[#allocation4] sm:$0x1] %vm419, %v418
    %vm421 = vcmask 550914
    %422 = vst.msk [vmem:[#allocation4 - $0x1] sm:$0x4] %vm421, %v418
    %vm423 = vcmask 552964
    %424 = vst.msk [vmem:[#allocation4 - $0x2] sm:$0x10] %vm423, %v418
    %vm425 = vcmask 555014
    %426 = vst.msk [vmem:[#allocation4 - $0x3] sm:$0x40] %vm425, %v418
    %v428 = vrot.slane %v397, 1
    %v430 = vmax.f32 %v397, %v428
    %431 = vst.msk [vmem:[#allocation4 + $0x4] sm:$0x1] %vm419, %v430
    %432 = vst.msk [vmem:[#allocation4 + $0x3] sm:$0x4] %vm421, %v430
    %433 = vst.msk [vmem:[#allocation4 + $0x2] sm:$0x10] %vm423, %v430
    %434 = vst.msk [vmem:[#allocation4 + $0x1] sm:$0x40] %vm425, %v430
    %v436 = vrot.slane %v402, 1
    %v438 = vmax.f32 %v402, %v436
    %vm439 = vcmask 549889
    %440 = vst.msk [vmem:[#allocation4 + $0x7] sm:$0x2] %vm439, %v438
    %vm441 = vcmask 551939
    %442 = vst.msk [vmem:[#allocation4 + $0x6] sm:$0x8] %vm441, %v438
    %vm443 = vcmask 553989
    %444 = vst.msk [vmem:[#allocation4 + $0x5] sm:$0x20] %vm443, %v438
    %v446 = vrot.slane %v407, 1
    %v448 = vmax.f32 %v402, %v446
    %vm449 = vcmask 556039
    %450 = vst.msk [vmem:[#allocation4 + $0x4] sm:$0x80] %vm449, %v448
    %v451 = vmax.f32 %v407, %v446
    %452 = vst.msk [vmem:[#allocation4 + $0xb] sm:$0x2] %vm439, %v451
    %453 = vst.msk [vmem:[#allocation4 + $0xa] sm:$0x8] %vm441, %v451
    %454 = vst.msk [vmem:[#allocation4 + $0x9] sm:$0x20] %vm443, %v451
    %v456 = vrot.slane %v412, 1
    %v458 = vmax.f32 %v407, %v456
    %459 = vst.msk [vmem:[#allocation4 + $0x8] sm:$0x80] %vm449, %v458
    %v460 = vld [vmem:[#allocation4] sm:$0xff]
    %v461 = vld [vmem:[#allocation4 + $0x8] sm:$0xff]
    %v462 = vld [vmem:[#allocation12 + $0x78] sm:$0xff]
    %v463 = vld [vmem:[#allocation12 + $0x80] sm:$0xff]
    %v464 = vld [vmem:[#allocation12 + $0x88] sm:$0xff]
    %v465 = vld [vmem:[#allocation12 + $0x90] sm:$0xff]
    %v466 = vld [vmem:[#allocation12 + $0x98] sm:$0xff]
    %v467 = vld [vmem:[#allocation12 + $0xa0] sm:$0xff]
    %v468 = vld [vmem:[#allocation12 + $0xa8] sm:$0xff]
    %v469 = vld [vmem:[#allocation12 + $0xb0] sm:$0xff]
    %v470 = vld [vmem:[#allocation12 + $0xb8] sm:$0xf]
    %v471 = vld [vmem:[#allocation12 + $0xbc] sm:$0xff]
    %v472 = vld [vmem:[#allocation12 + $0xc4] sm:$0xff]
    %v473 = vld [vmem:[#allocation12 + $0xcc] sm:$0xff]
    %v474 = vld [vmem:[#allocation12 + $0xd4] sm:$0xff]
    %v475 = vld [vmem:[#allocation12 + $0xdc] sm:$0xff]
    %v476 = vld [vmem:[#allocation12 + $0xe4] sm:$0xff]
    %v477 = vld [vmem:[#allocation12 + $0xec] sm:$0xff]
    %v478 = vld [vmem:[#allocation12 + $0xf4] sm:$0xff]
    %v479 = vld [vmem:[#allocation12 + $0xfc] sm:$0xf]
    %vm480 = vcmask 556032
    %v482 = vsel %vm480, %v460, 0
    %v485 = vsel %vm480, %v461, 0
    %vm487 = vcmask 1043456
    %v489 = vsel %vm487, %v470, 0
    %491 = vmatprep.subr.mxu0 0.0
    %492 = vmatpush1.msra.mxu0 %v462
    %493 = vmatprep.subr.mxu0 0.0
    %494 = vmatpush1.msra.mxu0 %v463
    %495 = vmatprep.subr.mxu0 0.0
    %496 = vmatpush1.msra.mxu0 %v464
    %497 = vmatprep.subr.mxu0 0.0
    %498 = vmatpush1.msra.mxu0 %v465
    %499 = vmatprep.subr.mxu0 0.0
    %500 = vmatpush1.msra.mxu0 %v466
    %501 = vmatprep.subr.mxu0 0.0
    %502 = vmatpush1.msra.mxu0 %v467
    %503 = vmatprep.subr.mxu0 0.0
    %504 = vmatpush1.msra.mxu0 %v468
    %505 = vmatprep.subr.mxu0 0.0
    %506 = vmatpush1.msra.mxu0 %v469
    %507 = vmatprep.subr.mxu0 0.0
    %508 = vmatpush1.msra.mxu0 %v489
    %509 = vmatprep.subr.mxu0 0.0
    %510 = vmatpush1.msra.mxu0 0.0
    %511 = vmatprep.subr.mxu0 0.0
    %512 = vmatpush1.msra.mxu0 0.0
    %513 = vmatprep.subr.mxu0 0.0
    %514 = vmatpush1.msra.mxu0 0.0
    %515 = vmatprep.subr.mxu0 0.0
    %516 = vmatpush1.msra.mxu0 0.0
    %517 = vmatprep.subr.mxu0 0.0
    %518 = vmatpush1.msra.mxu0 0.0
    %519 = vmatprep.subr.mxu0 0.0
    %520 = vmatpush1.msra.mxu0 0.0
    %521 = vmatprep.subr.mxu0 0.0
    %522 = vmatpush1.msra.mxu0 0.0
    %523 = vmatprep.subr.mxu0 0.0
    %524 = vmatpush1.msra.mxu0 0.0
    %525 = vmatprep.subr.mxu0 0.0
    %526 = vmatpush1.msra.mxu0 0.0
    %527 = vmatprep.subr.mxu0 0.0
    %528 = vmatpush1.msra.mxu0 0.0
    %529 = vmatprep.subr.mxu0 0.0
    %530 = vmatpush1.msra.mxu0 0.0
    %531 = vmatprep.subr.mxu0 0.0
    %532 = vmatpush1.msra.mxu0 0.0
    %533 = vmatprep.subr.mxu0 0.0
    %534 = vmatpush1.msra.mxu0 0.0
    %535 = vmatprep.subr.mxu0 0.0
    %536 = vmatpush1.msra.mxu0 0.0
    %537 = vmatprep.subr.mxu0 0.0
    %538 = vmatpush1.msra.mxu0 0.0
    %539 = vmatprep.subr.mxu0 0.0
    %540 = vmatpush1.msra.mxu0 0.0
    %541 = vmatprep.subr.mxu0 0.0
    %542 = vmatpush1.msra.mxu0 0.0
    %543 = vmatprep.subr.mxu0 0.0
    %544 = vmatpush1.msra.mxu0 0.0
    %545 = vmatprep.subr.mxu0 0.0
    %546 = vmatpush1.msra.mxu0 0.0
    %547 = vmatprep.subr.mxu0 0.0
    %548 = vmatpush1.msra.mxu0 0.0
    %549 = vmatprep.subr.mxu0 0.0
    %550 = vmatpush1.msra.mxu0 0.0
    %551 = vmatprep.subr.mxu0 0.0
    %552 = vmatpush1.msra.mxu0 0.0
    %553 = vmatprep.subr.mxu0 0.0
    %554 = vmatpush1.msra.mxu0 0.0
    %555 = vmatprep.mubr.f32.mxu0 0.0
    %556 = vmatmul.mubr.f32.gmra.mrb[0].mxu0 %v482
    %v557 = vpop.f32.mrb[0].mxu0
    %v558 = vadd.f32 0.0, %v557
    %v559 = vpop.f32.mrb[0].mxu0
    %560 = vmatprep.mubr.f32.mxu0 0.0
    %561 = vmatmul.mubr.f32.gmra.mrb[0].mxu0 %v485
    %v562 = vpop.f32.mrb[0].mxu0
    %v563 = vadd.f32 0.0, %v562
    %v564 = vpop.f32.mrb[0].mxu0
    %565 = vdwg.mxu0
    %v567 = vsel %vm487, %v479, 0
    %569 = vmatprep.subr.mxu0 0.0
    %570 = vmatpush1.msra.mxu0 %v471
    %571 = vmatprep.subr.mxu0 0.0
    %572 = vmatpush1.msra.mxu0 %v472
    %573 = vmatprep.subr.mxu0 0.0
    %574 = vmatpush1.msra.mxu0 %v473
    %575 = vmatprep.subr.mxu0 0.0
    %576 = vmatpush1.msra.mxu0 %v474
    %577 = vmatprep.subr.mxu0 0.0
    %578 = vmatpush1.msra.mxu0 %v475
    %579 = vmatprep.subr.mxu0 0.0
    %580 = vmatpush1.msra.mxu0 %v476
    %581 = vmatprep.subr.mxu0 0.0
    %582 = vmatpush1.msra.mxu0 %v477
    %583 = vmatprep.subr.mxu0 0.0
    %584 = vmatpush1.msra.mxu0 %v478
    %585 = vmatprep.subr.mxu0 0.0
    %586 = vmatpush1.msra.mxu0 %v567
    %587 = vmatprep.subr.mxu0 0.0
    %588 = vmatpush1.msra.mxu0 0.0
    %589 = vmatprep.subr.mxu0 0.0
    %590 = vmatpush1.msra.mxu0 0.0
    %591 = vmatprep.subr.mxu0 0.0
    %592 = vmatpush1.msra.mxu0 0.0
    %593 = vmatprep.subr.mxu0 0.0
    %594 = vmatpush1.msra.mxu0 0.0
    %595 = vmatprep.subr.mxu0 0.0
    %596 = vmatpush1.msra.mxu0 0.0
    %597 = vmatprep.subr.mxu0 0.0
    %598 = vmatpush1.msra.mxu0 0.0
    %599 = vmatprep.subr.mxu0 0.0
    %600 = vmatpush1.msra.mxu0 0.0
    %601 = vmatprep.subr.mxu0 0.0
    %602 = vmatpush1.msra.mxu0 0.0
    %603 = vmatprep.subr.mxu0 0.0
    %604 = vmatpush1.msra.mxu0 0.0
    %605 = vmatprep.subr.mxu0 0.0
    %606 = vmatpush1.msra.mxu0 0.0
    %607 = vmatprep.subr.mxu0 0.0
    %608 = vmatpush1.msra.mxu0 0.0
    %609 = vmatprep.subr.mxu0 0.0
    %610 = vmatpush1.msra.mxu0 0.0
    %611 = vmatprep.subr.mxu0 0.0
    %612 = vmatpush1.msra.mxu0 0.0
    %613 = vmatprep.subr.mxu0 0.0
    %614 = vmatpush1.msra.mxu0 0.0
    %615 = vmatprep.subr.mxu0 0.0
    %616 = vmatpush1.msra.mxu0 0.0
    %617 = vmatprep.subr.mxu0 0.0
    %618 = vmatpush1.msra.mxu0 0.0
    %619 = vmatprep.subr.mxu0 0.0
    %620 = vmatpush1.msra.mxu0 0.0
    %621 = vmatprep.subr.mxu0 0.0
    %622 = vmatpush1.msra.mxu0 0.0
    %623 = vmatprep.subr.mxu0 0.0
    %624 = vmatpush1.msra.mxu0 0.0
    %625 = vmatprep.subr.mxu0 0.0
    %626 = vmatpush1.msra.mxu0 0.0
    %627 = vmatprep.subr.mxu0 0.0
    %628 = vmatpush1.msra.mxu0 0.0
    %629 = vmatprep.subr.mxu0 0.0
    %630 = vmatpush1.msra.mxu0 0.0
    %631 = vmatprep.subr.mxu0 0.0
    %632 = vmatpush1.msra.mxu0 0.0
    %633 = vmatprep.mubr.f32.mxu0 0.0
    %634 = vmatmul.mubr.f32.gmra.mrb[0].mxu0 %v482
    %v635 = vpop.f32.mrb[0].mxu0
    %v636 = vadd.f32 0.0, %v635
    %v637 = vpop.f32.mrb[0].mxu0
    %638 = vmatprep.mubr.f32.mxu0 0.0
    %639 = vmatmul.mubr.f32.gmra.mrb[0].mxu0 %v485
    %v640 = vpop.f32.mrb[0].mxu0
    %v641 = vadd.f32 0.0, %v640
    %v642 = vpop.f32.mrb[0].mxu0
    %643 = vdwg.mxu0
    %v644 = vmax.f32 %v558, %v636
    %v645 = vmax.f32 %v563, %v641
    %v646 = vld [vmem:[#allocation12 + $0x100] sm:$0x1]
    %v647 = vlaneseq
    %v648 = vshrl.u32 %v647, 7
    %v649 = vsub.s32 0, %v648
    %v650 = vrot.slane %v646, %v649
    %v651 = vadd.f32 %v644, %v650
    %v652 = vadd.f32 %v645, %v650
    %v653 = vmax.f32 %v651, 0.0
    %v654 = vmax.f32 %v652, 0.0
    %655 = vst.msk [vmem:[#allocation5] sm:$0x7] %vm144, 0.0
    %656 = vst.msk [vmem:[#allocation5 + $0x3] sm:$0xff] %vm146, %v653
    %657 = vst.msk [vmem:[#allocation5 + $0xb] sm:$0x7] %vm144, 0.0
    %658 = vst.msk [vmem:[#allocation5 + $0xe] sm:$0x7] %vm144, 0.0
    %659 = vst.msk [vmem:[#allocation5 + $0x11] sm:$0xff] %vm146, %v654
    %660 = vst.msk [vmem:[#allocation5 + $0x19] sm:$0x7] %vm144, 0.0
    %v661 = vld [vmem:[#allocation12 + $0x108] sm:$0x1]
    %v662 = vld [vmem:[#allocation12 + $0x109] sm:$0x1]
    %v663 = vld [vmem:[#allocation12 + $0x10a] sm:$0x1]
    %v664 = vld [vmem:[#allocation5] sm:$0xff]
    %v665 = vld [vmem:[#allocation5 + $0x8] sm:$0xf]
    %v666 = vlaneseq
    %v667 = vshrl.u32 %v666, 7
    %v668 = vsub.s32 0, %v667
    %v669 = vrot.slane %v661, %v668
    %v670 = vmul.f32 %v669, %v664
    %v671 = vmul.f32 %v669, %v665
    %v672 = vld [vmem:[#allocation5 + $0x1] sm:$0xff]
    %v673 = vld [vmem:[#allocation5 + $0x9] sm:$0xf]
    %v674 = vlaneseq
    %v675 = vshrl.u32 %v674, 7
    %v676 = vsub.s32 0, %v675
    %v677 = vrot.slane %v662, %v676
    %v678 = vmul.f32 %v677, %v672
    %v679 = vmul.f32 %v677, %v673
    %v680 = vadd.f32 %v670, %v678
    %v681 = vadd.f32 %v671, %v679
    %v682 = vld [vmem:[#allocation5 + $0x2] sm:$0xff]
    %v683 = vld [vmem:[#allocation5 + $0xa] sm:$0xf]
    %v684 = vlaneseq
    %v685 = vshrl.u32 %v684, 7
    %v686 = vsub.s32 0, %v685
    %v687 = vrot.slane %v663, %v686
    %v688 = vmul.f32 %v687, %v682
    %v689 = vmul.f32 %v687, %v683
    %v690 = vadd.f32 %v680, %v688
    %v691 = vadd.f32 %v681, %v689
    %692 = vst.msk [vmem:[#allocation6] sm:$0xff] %vm146, %v690
    %vm693 = vcmask 781312
    %694 = vst.msk [vmem:[#allocation6 + $0x8] sm:$0xf] %vm693, %v691
    %v695 = vld [vmem:[#allocation5 + $0xe] sm:$0xff]
    %v696 = vld [vmem:[#allocation5 + $0x16] sm:$0xf]
    %v697 = vmul.f32 %v669, %v695
    %v698 = vmul.f32 %v669, %v696
    %v699 = vld [vmem:[#allocation5 + $0xf] sm:$0xff]
    %v700 = vld [vmem:[#allocation5 + $0x17] sm:$0xf]
    %v701 = vmul.f32 %v677, %v699
    %v702 = vmul.f32 %v677, %v700
    %v703 = vadd.f32 %v697, %v701
    %v704 = vadd.f32 %v698, %v702
    %v705 = vld [vmem:[#allocation5 + $0x10] sm:$0xff]
    %v706 = vld [vmem:[#allocation5 + $0x18] sm:$0xf]
    %v707 = vmul.f32 %v687, %v705
    %v708 = vmul.f32 %v687, %v706
    %v709 = vadd.f32 %v703, %v707
    %v710 = vadd.f32 %v704, %v708
    %711 = vst.msk [vmem:[#allocation6 + $0xc] sm:$0xff] %vm146, %v709
    %712 = vst.msk [vmem:[#allocation6 + $0x14] sm:$0xf] %vm693, %v710
    %v713 = vld [vmem:[#allocation6] sm:$0xff]
    %v714 = vld [vmem:[#allocation6 + $0x8] sm:$0xff]
    %v715 = vld [vmem:[#allocation6 + $0x10] sm:$0xff]
    %v716 = vld [vmem:[#allocation12 + $0x110] sm:$0xff]
    %v717 = vld [vmem:[#allocation12 + $0x118] sm:$0xff]
    %v718 = vld [vmem:[#allocation12 + $0x120] sm:$0xff]
    %v719 = vld [vmem:[#allocation12 + $0x128] sm:$0xff]
    %v720 = vld [vmem:[#allocation12 + $0x130] sm:$0xff]
    %v721 = vld [vmem:[#allocation12 + $0x138] sm:$0xff]
    %v722 = vld [vmem:[#allocation12 + $0x140] sm:$0xff]
    %v723 = vld [vmem:[#allocation12 + $0x148] sm:$0xff]
    %v724 = vld [vmem:[#allocation12 + $0x150] sm:$0xff]
    %v725 = vld [vmem:[#allocation12 + $0x158] sm:$0xff]
    %v726 = vld [vmem:[#allocation12 + $0x160] sm:$0xff]
    %v727 = vld [vmem:[#allocation12 + $0x168] sm:$0xff]
    %v729 = vsel %vm146, %v713, 0
    %v732 = vsel %vm146, %v714, 0
    %v735 = vsel %vm146, %v715, 0
    %737 = vmatprep.subr.mxu0 0.0
    %738 = vmatpush1.msra.mxu0 %v716
    %739 = vmatprep.subr.mxu0 0.0
    %740 = vmatpush1.msra.mxu0 %v717
    %741 = vmatprep.subr.mxu0 0.0
    %742 = vmatpush1.msra.mxu0 %v718
    %743 = vmatprep.subr.mxu0 0.0
    %744 = vmatpush1.msra.mxu0 %v719
    %745 = vmatprep.subr.mxu0 0.0
    %746 = vmatpush1.msra.mxu0 %v720
    %747 = vmatprep.subr.mxu0 0.0
    %748 = vmatpush1.msra.mxu0 %v721
    %749 = vmatprep.subr.mxu0 0.0
    %750 = vmatpush1.msra.mxu0 %v722
    %751 = vmatprep.subr.mxu0 0.0
    %752 = vmatpush1.msra.mxu0 %v723
    %753 = vmatprep.subr.mxu0 0.0
    %754 = vmatpush1.msra.mxu0 %v724
    %755 = vmatprep.subr.mxu0 0.0
    %756 = vmatpush1.msra.mxu0 %v725
    %757 = vmatprep.subr.mxu0 0.0
    %758 = vmatpush1.msra.mxu0 %v726
    %759 = vmatprep.subr.mxu0 0.0
    %760 = vmatpush1.msra.mxu0 %v727
    %761 = vmatprep.subr.mxu0 0.0
    %762 = vmatpush1.msra.mxu0 0.0
    %763 = vmatprep.subr.mxu0 0.0
    %764 = vmatpush1.msra.mxu0 0.0
    %765 = vmatprep.subr.mxu0 0.0
    %766 = vmatpush1.msra.mxu0 0.0
    %767 = vmatprep.subr.mxu0 0.0
    %768 = vmatpush1.msra.mxu0 0.0
    %769 = vmatprep.subr.mxu0 0.0
    %770 = vmatpush1.msra.mxu0 0.0
    %771 = vmatprep.subr.mxu0 0.0
    %772 = vmatpush1.msra.mxu0 0.0
    %773 = vmatprep.subr.mxu0 0.0
    %774 = vmatpush1.msra.mxu0 0.0
    %775 = vmatprep.subr.mxu0 0.0
    %776 = vmatpush1.msra.mxu0 0.0
    %777 = vmatprep.subr.mxu0 0.0
    %778 = vmatpush1.msra.mxu0 0.0
    %779 = vmatprep.subr.mxu0 0.0
    %780 = vmatpush1.msra.mxu0 0.0
    %781 = vmatprep.subr.mxu0 0.0
    %782 = vmatpush1.msra.mxu0 0.0
    %783 = vmatprep.subr.mxu0 0.0
    %784 = vmatpush1.msra.mxu0 0.0
    %785 = vmatprep.subr.mxu0 0.0
    %786 = vmatpush1.msra.mxu0 0.0
    %787 = vmatprep.subr.mxu0 0.0
    %788 = vmatpush1.msra.mxu0 0.0
    %789 = vmatprep.subr.mxu0 0.0
    %790 = vmatpush1.msra.mxu0 0.0
    %791 = vmatprep.subr.mxu0 0.0
    %792 = vmatpush1.msra.mxu0 0.0
    %793 = vmatprep.subr.mxu0 0.0
    %794 = vmatpush1.msra.mxu0 0.0
    %795 = vmatprep.subr.mxu0 0.0
    %796 = vmatpush1.msra.mxu0 0.0
    %797 = vmatprep.subr.mxu0 0.0
    %798 = vmatpush1.msra.mxu0 0.0
    %799 = vmatprep.subr.mxu0 0.0
    %800 = vmatpush1.msra.mxu0 0.0
    %801 = vmatprep.mubr.f32.mxu0 0.0
    %802 = vmatmul.mubr.f32.gmra.mrb[0].mxu0 %v729
    %v803 = vpop.f32.mrb[0].mxu0
    %v804 = vadd.f32 0.0, %v803
    %v805 = vpop.f32.mrb[0].mxu0
    %806 = vmatprep.mubr.f32.mxu0 0.0
    %807 = vmatmul.mubr.f32.gmra.mrb[0].mxu0 %v732
    %v808 = vpop.f32.mrb[0].mxu0
    %v809 = vadd.f32 0.0, %v808
    %v810 = vpop.f32.mrb[0].mxu0
    %811 = vmatprep.mubr.f32.mxu0 0.0
    %812 = vmatmul.mubr.f32.gmra.mrb[0].mxu0 %v735
    %v813 = vpop.f32.mrb[0].mxu0
    %v814 = vadd.f32 0.0, %v813
    %v815 = vpop.f32.mrb[0].mxu0
    %816 = vdwg.mxu0
    %v818 = vrot.slane %v804, 1
    %v820 = vmax.f32 %v804, %v818
    %vm821 = vcmask 188416
    %822 = vst.msk [vmem:[#allocation7] sm:$0x1] %vm821, %v820
    %vm823 = vcmask 190466
    %824 = vst.msk [vmem:[#allocation7 - $0x1] sm:$0x4] %vm823, %v820
    %vm825 = vcmask 192516
    %826 = vst.msk [vmem:[#allocation7 - $0x2] sm:$0x10] %vm825, %v820
    %vm827 = vcmask 194566
    %828 = vst.msk [vmem:[#allocation7 - $0x3] sm:$0x40] %vm827, %v820
    %v830 = vrot.slane %v809, 1
    %v832 = vmax.f32 %v809, %v830
    %833 = vst.msk [vmem:[#allocation7 + $0x4] sm:$0x1] %vm821, %v832
    %834 = vst.msk [vmem:[#allocation7 + $0x3] sm:$0x4] %vm823, %v832
    %835 = vst.msk [vmem:[#allocation7 + $0x2] sm:$0x10] %vm825, %v832
    %836 = vst.msk [vmem:[#allocation7 + $0x1] sm:$0x40] %vm827, %v832
    %v838 = vrot.slane %v814, 1
    %v840 = vmax.f32 %v814, %v838
    %841 = vst.msk [vmem:[#allocation7 + $0x8] sm:$0x1] %vm821, %v840
    %842 = vst.msk [vmem:[#allocation7 + $0x7] sm:$0x4] %vm823, %v840
    %843 = vst.msk [vmem:[#allocation7 + $0x6] sm:$0x10] %vm825, %v840
    %844 = vst.msk [vmem:[#allocation7 + $0x5] sm:$0x40] %vm827, %v840
    %v845 = vld [vmem:[#allocation7] sm:$0xff]
    %v846 = vld [vmem:[#allocation7 + $0x8] sm:$0xf]
    %v847 = vld [vmem:[#allocation12 + $0x170] sm:$0xff]
    %v848 = vld [vmem:[#allocation12 + $0x178] sm:$0xff]
    %v849 = vld [vmem:[#allocation12 + $0x180] sm:$0xff]
    %v850 = vld [vmem:[#allocation12 + $0x188] sm:$0xff]
    %v851 = vld [vmem:[#allocation12 + $0x190] sm:$0xff]
    %v852 = vld [vmem:[#allocation12 + $0x198] sm:$0xff]
    %vm853 = vcmask 195584
    %v855 = vsel %vm853, %v845, 0
    %v858 = vsel %vm853, %v846, 0
    %860 = vmatprep.subr.mxu0 0.0
    %861 = vmatpush1.msra.mxu0 %v847
    %862 = vmatprep.subr.mxu0 0.0
    %863 = vmatpush1.msra.mxu0 %v848
    %864 = vmatprep.subr.mxu0 0.0
    %865 = vmatpush1.msra.mxu0 %v849
    %866 = vmatprep.subr.mxu0 0.0
    %867 = vmatpush1.msra.mxu0 0.0
    %868 = vmatprep.subr.mxu0 0.0
    %869 = vmatpush1.msra.mxu0 0.0
    %870 = vmatprep.subr.mxu0 0.0
    %871 = vmatpush1.msra.mxu0 0.0
    %872 = vmatprep.subr.mxu0 0.0
    %873 = vmatpush1.msra.mxu0 0.0
    %874 = vmatprep.subr.mxu0 0.0
    %875 = vmatpush1.msra.mxu0 0.0
    %876 = vmatprep.subr.mxu0 0.0
    %877 = vmatpush1.msra.mxu0 0.0
    %878 = vmatprep.subr.mxu0 0.0
    %879 = vmatpush1.msra.mxu0 0.0
    %880 = vmatprep.subr.mxu0 0.0
    %881 = vmatpush1.msra.mxu0 0.0
    %882 = vmatprep.subr.mxu0 0.0
    %883 = vmatpush1.msra.mxu0 0.0
    %884 = vmatprep.subr.mxu0 0.0
    %885 = vmatpush1.msra.mxu0 0.0
    %886 = vmatprep.subr.mxu0 0.0
    %887 = vmatpush1.msra.mxu0 0.0
    %888 = vmatprep.subr.mxu0 0.0
    %889 = vmatpush1.msra.mxu0 0.0
    %890 = vmatprep.subr.mxu0 0.0
    %891 = vmatpush1.msra.mxu0 0.0
    %892 = vmatprep.subr.mxu0 0.0
    %893 = vmatpush1.msra.mxu0 0.0
    %894 = vmatprep.subr.mxu0 0.0
    %895 = vmatpush1.msra.mxu0 0.0
    %896 = vmatprep.subr.mxu0 0.0
    %897 = vmatpush1.msra.mxu0 0.0
    %898 = vmatprep.subr.mxu0 0.0
    %899 = vmatpush1.msra.mxu0 0.0
    %900 = vmatprep.subr.mxu0 0.0
    %901 = vmatpush1.msra.mxu0 0.0
    %902 = vmatprep.subr.mxu0 0.0
    %903 = vmatpush1.msra.mxu0 0.0
    %904 = vmatprep.subr.mxu0 0.0
    %905 = vmatpush1.msra.mxu0 0.0
    %906 = vmatprep.subr.mxu0 0.0
    %907 = vmatpush1.msra.mxu0 0.0
    %908 = vmatprep.subr.mxu0 0.0
    %909 = vmatpush1.msra.mxu0 0.0
    %910 = vmatprep.subr.mxu0 0.0
    %911 = vmatpush1.msra.mxu0 0.0
    %912 = vmatprep.subr.mxu0 0.0
    %913 = vmatpush1.msra.mxu0 0.0
    %914 = vmatprep.subr.mxu0 0.0
    %915 = vmatpush1.msra.mxu0 0.0
    %916 = vmatprep.subr.mxu0 0.0
    %917 = vmatpush1.msra.mxu0 0.0
    %918 = vmatprep.subr.mxu0 0.0
    %919 = vmatpush1.msra.mxu0 0.0
    %920 = vmatprep.subr.mxu0 0.0
    %921 = vmatpush1.msra.mxu0 0.0
    %922 = vmatprep.subr.mxu0 0.0
    %923 = vmatpush1.msra.mxu0 0.0
    %924 = vmatprep.mubr.f32.mxu0 0.0
    %925 = vmatmul.mubr.f32.gmra.mrb[0].mxu0 %v855
    %v926 = vpop.f32.mrb[0].mxu0
    %v927 = vadd.f32 0.0, %v926
    %v928 = vpop.f32.mrb[0].mxu0
    %929 = vmatprep.mubr.f32.mxu0 0.0
    %930 = vmatmul.mubr.f32.gmra.mrb[0].mxu0 %v858
    %v931 = vpop.f32.mrb[0].mxu0
    %v932 = vadd.f32 0.0, %v931
    %v933 = vpop.f32.mrb[0].mxu0
    %934 = vdwg.mxu0
    %935 = vmatprep.subr.mxu0 0.0
    %936 = vmatpush1.msra.mxu0 %v850
    %937 = vmatprep.subr.mxu0 0.0
    %938 = vmatpush1.msra.mxu0 %v851
    %939 = vmatprep.subr.mxu0 0.0
    %940 = vmatpush1.msra.mxu0 %v852
    %941 = vmatprep.subr.mxu0 0.0
    %942 = vmatpush1.msra.mxu0 0.0
    %943 = vmatprep.subr.mxu0 0.0
    %944 = vmatpush1.msra.mxu0 0.0
    %945 = vmatprep.subr.mxu0 0.0
    %946 = vmatpush1.msra.mxu0 0.0
    %947 = vmatprep.subr.mxu0 0.0
    %948 = vmatpush1.msra.mxu0 0.0
    %949 = vmatprep.subr.mxu0 0.0
    %950 = vmatpush1.msra.mxu0 0.0
    %951 = vmatprep.subr.mxu0 0.0
    %952 = vmatpush1.msra.mxu0 0.0
    %953 = vmatprep.subr.mxu0 0.0
    %954 = vmatpush1.msra.mxu0 0.0
    %955 = vmatprep.subr.mxu0 0.0
    %956 = vmatpush1.msra.mxu0 0.0
    %957 = vmatprep.subr.mxu0 0.0
    %958 = vmatpush1.msra.mxu0 0.0
    %959 = vmatprep.subr.mxu0 0.0
    %960 = vmatpush1.msra.mxu0 0.0
    %961 = vmatprep.subr.mxu0 0.0
    %962 = vmatpush1.msra.mxu0 0.0
    %963 = vmatprep.subr.mxu0 0.0
    %964 = vmatpush1.msra.mxu0 0.0
    %965 = vmatprep.subr.mxu0 0.0
    %966 = vmatpush1.msra.mxu0 0.0
    %967 = vmatprep.subr.mxu0 0.0
    %968 = vmatpush1.msra.mxu0 0.0
    %969 = vmatprep.subr.mxu0 0.0
    %970 = vmatpush1.msra.mxu0 0.0
    %971 = vmatprep.subr.mxu0 0.0
    %972 = vmatpush1.msra.mxu0 0.0
    %973 = vmatprep.subr.mxu0 0.0
    %974 = vmatpush1.msra.mxu0 0.0
    %975 = vmatprep.subr.mxu0 0.0
    %976 = vmatpush1.msra.mxu0 0.0
    %977 = vmatprep.subr.mxu0 0.0
    %978 = vmatpush1.msra.mxu0 0.0
    %979 = vmatprep.subr.mxu0 0.0
    %980 = vmatpush1.msra.mxu0 0.0
    %981 = vmatprep.subr.mxu0 0.0
    %982 = vmatpush1.msra.mxu0 0.0
    %983 = vmatprep.subr.mxu0 0.0
    %984 = vmatpush1.msra.mxu0 0.0
    %985 = vmatprep.subr.mxu0 0.0
    %986 = vmatpush1.msra.mxu0 0.0
    %987 = vmatprep.subr.mxu0 0.0
    %988 = vmatpush1.msra.mxu0 0.0
    %989 = vmatprep.subr.mxu0 0.0
    %990 = vmatpush1.msra.mxu0 0.0
    %991 = vmatprep.subr.mxu0 0.0
    %992 = vmatpush1.msra.mxu0 0.0
    %993 = vmatprep.subr.mxu0 0.0
    %994 = vmatpush1.msra.mxu0 0.0
    %995 = vmatprep.subr.mxu0 0.0
    %996 = vmatpush1.msra.mxu0 0.0
    %997 = vmatprep.subr.mxu0 0.0
    %998 = vmatpush1.msra.mxu0 0.0
    %999 = vmatprep.mubr.f32.mxu0 0.0
    %1000 = vmatmul.mubr.f32.gmra.mrb[0].mxu0 %v855
    %v1001 = vpop.f32.mrb[0].mxu0
    %v1002 = vadd.f32 0.0, %v1001
    %v1003 = vpop.f32.mrb[0].mxu0
    %1004 = vmatprep.mubr.f32.mxu0 0.0
    %1005 = vmatmul.mubr.f32.gmra.mrb[0].mxu0 %v858
    %v1006 = vpop.f32.mrb[0].mxu0
    %v1007 = vadd.f32 0.0, %v1006
    %v1008 = vpop.f32.mrb[0].mxu0
    %1009 = vdwg.mxu0
    %v1010 = vmax.f32 %v927, %v1002
    %v1011 = vmax.f32 %v932, %v1007
    %v1012 = vld [vmem:[#allocation12 + $0x1a0] sm:$0x1]
    %v1013 = vlaneseq
    %v1014 = vshrl.u32 %v1013, 7
    %v1015 = vsub.s32 0, %v1014
    %v1016 = vrot.slane %v1012, %v1015
    %v1017 = vadd.f32 %v1010, %v1016
    %v1018 = vadd.f32 %v1011, %v1016
    %v1019 = vmax.f32 %v1017, 0.0
    %v1020 = vmax.f32 %v1018, 0.0
    %v1021 = vld [vmem:[#allocation12 + $0x1a8] sm:$0x1]
    %v1022 = vld [vmem:[#allocation12 + $0x1a9] sm:$0x1]
    %v1023 = vld [vmem:[#allocation12 + $0x1aa] sm:$0x1]
    %v1024 = vld [vmem:[#allocation12 + $0x1ab] sm:$0x1]
    %v1025 = vld [vmem:[#allocation12 + $0x1ac] sm:$0x1]
    %v1026 = vld [vmem:[#allocation12 + $0x1ad] sm:$0x1]
    %v1027 = vmul.f32 %v1021, %v1019
    %v1029 = vrot.slane %v1019, 1
    %v1031 = vmul.f32 %v1022, %v1029
    %v1032 = vadd.f32 %v1027, %v1031
    %v1033 = vrot.slane %v1019, 2
    %v1035 = vmul.f32 %v1023, %v1033
    %v1036 = vadd.f32 %v1032, %v1035
    %v1037 = vrot.slane %v1019, 3
    %v1039 = vmul.f32 %v1024, %v1037
    %v1040 = vadd.f32 %v1036, %v1039
    %v1041 = vrot.slane %v1019, 4
    %v1043 = vmul.f32 %v1025, %v1041
    %v1044 = vadd.f32 %v1040, %v1043
    %v1045 = vrot.slane %v1019, 5
    %v1047 = vmul.f32 %v1026, %v1045
    %v1048 = vadd.f32 %v1044, %v1047
    %vm1049 = vcmask 581632
    %1050 = vst.msk [vmem:[#allocation8] sm:$0x1] %vm1049, %v1048
    %v1051 = vrot.slane %v1019, 6
    %v1053 = vmul.f32 %v1021, %v1051
    %v1054 = vrot.slane %v1019, 7
    %v1056 = vmul.f32 %v1022, %v1054
    %v1057 = vadd.f32 %v1053, %v1056
    %v1058 = vmul.f32 %v1023, %v1020
    %v1059 = vadd.f32 %v1057, %v1058
    %v1061 = vrot.slane %v1020, 1
    %v1063 = vmul.f32 %v1024, %v1061
    %v1064 = vadd.f32 %v1059, %v1063
    %v1065 = vrot.slane %v1020, 2
    %v1067 = vmul.f32 %v1025, %v1065
    %v1068 = vadd.f32 %v1064, %v1067
    %v1069 = vrot.slane %v1020, 3
    %v1071 = vmul.f32 %v1026, %v1069
    %v1072 = vadd.f32 %v1068, %v1071
    %1073 = vst.msk [vmem:[#allocation8 + $0x1] sm:$0x1] %vm1049, %v1072
    %v1074 = vld [vmem:[#allocation8] sm:$0x3]
    %v1075 = vld [vmem:[#allocation12 + $0x1b0] sm:$0xff]
    %v1076 = vld [vmem:[#allocation12 + $0x1b8] sm:$0xff]
    %v1077 = vld [vmem:[#allocation12 + $0x1c0] sm:$0xff]
    %v1078 = vld [vmem:[#allocation12 + $0x1c8] sm:$0xff]
    %v1079 = vld [vmem:[#allocation12 + $0x1d0] sm:$0xff]
    %v1080 = vld [vmem:[#allocation12 + $0x1d8] sm:$0xff]
    %v1081 = vld [vmem:[#allocation12 + $0x1e0] sm:$0xff]
    %v1082 = vld [vmem:[#allocation12 + $0x1e8] sm:$0xff]
    %v1083 = vld [vmem:[#allocation12 + $0x1f0] sm:$0xff]
    %v1084 = vld [vmem:[#allocation12 + $0x1f8] sm:$0x1]
    %v1085 = vlaneseq
    %v1086 = vshrl.u32 %v1085, 7
    %v1087 = vsub.s32 0, %v1086
    %v1088 = vrot.slane %v1084, %v1087
    %vm1089 = vcmask 588800
    %v1091 = vsel %vm1089, %v1074, 0
    %1093 = vmatprep.subr.mxu0 0.0
    %1094 = vmatpush1.msra.mxu0 %v1075
    %1095 = vmatprep.subr.mxu0 0.0
    %1096 = vmatpush1.msra.mxu0 %v1076
    %1097 = vmatprep.subr.mxu0 0.0
    %1098 = vmatpush1.msra.mxu0 %v1077
    %1099 = vmatprep.subr.mxu0 0.0
    %1100 = vmatpush1.msra.mxu0 %v1078
    %1101 = vmatprep.subr.mxu0 0.0
    %1102 = vmatpush1.msra.mxu0 %v1079
    %1103 = vmatprep.subr.mxu0 0.0
    %1104 = vmatpush1.msra.mxu0 %v1080
    %1105 = vmatprep.subr.mxu0 0.0
    %1106 = vmatpush1.msra.mxu0 %v1081
    %1107 = vmatprep.subr.mxu0 0.0
    %1108 = vmatpush1.msra.mxu0 %v1082
    %1109 = vmatprep.subr.mxu0 0.0
    %1110 = vmatpush1.msra.mxu0 %v1083
    %1111 = vmatprep.subr.mxu0 0.0
    %1112 = vmatpush1.msra.mxu0 0.0
    %1113 = vmatprep.subr.mxu0 0.0
    %1114 = vmatpush1.msra.mxu0 0.0
    %1115 = vmatprep.subr.mxu0 0.0
    %1116 = vmatpush1.msra.mxu0 0.0
    %1117 = vmatprep.subr.mxu0 0.0
    %1118 = vmatpush1.msra.mxu0 0.0
    %1119 = vmatprep.subr.mxu0 0.0
    %1120 = vmatpush1.msra.mxu0 0.0
    %1121 = vmatprep.subr.mxu0 0.0
    %1122 = vmatpush1.msra.mxu0 0.0
    %1123 = vmatprep.subr.mxu0 0.0
    %1124 = vmatpush1.msra.mxu0 0.0
    %1125 = vmatprep.subr.mxu0 0.0
    %1126 = vmatpush1.msra.mxu0 0.0
    %1127 = vmatprep.subr.mxu0 0.0
    %1128 = vmatpush1.msra.mxu0 0.0
    %1129 = vmatprep.subr.mxu0 0.0
    %1130 = vmatpush1.msra.mxu0 0.0
    %1131 = vmatprep.subr.mxu0 0.0
    %1132 = vmatpush1.msra.mxu0 0.0
    %1133 = vmatprep.subr.mxu0 0.0
    %1134 = vmatpush1.msra.mxu0 0.0
    %1135 = vmatprep.subr.mxu0 0.0
    %1136 = vmatpush1.msra.mxu0 0.0
    %1137 = vmatprep.subr.mxu0 0.0
    %1138 = vmatpush1.msra.mxu0 0.0
    %1139 = vmatprep.subr.mxu0 0.0
    %1140 = vmatpush1.msra.mxu0 0.0
    %1141 = vmatprep.subr.mxu0 0.0
    %1142 = vmatpush1.msra.mxu0 0.0
    %1143 = vmatprep.subr.mxu0 0.0
    %1144 = vmatpush1.msra.mxu0 0.0
    %1145 = vmatprep.subr.mxu0 0.0
    %1146 = vmatpush1.msra.mxu0 0.0
    %1147 = vmatprep.subr.mxu0 0.0
    %1148 = vmatpush1.msra.mxu0 0.0
    %1149 = vmatprep.subr.mxu0 0.0
    %1150 = vmatpush1.msra.mxu0 0.0
    %1151 = vmatprep.subr.mxu0 0.0
    %1152 = vmatpush1.msra.mxu0 0.0
    %1153 = vmatprep.subr.mxu0 0.0
    %1154 = vmatpush1.msra.mxu0 0.0
    %1155 = vmatprep.subr.mxu0 0.0
    %1156 = vmatpush1.msra.mxu0 0.0
    %1157 = vmatprep.mubr.f32.mxu0 0.0
    %1158 = vmatmul.mubr.f32.gmra.mrb[0].mxu0 %v1091
    %v1159 = vpop.f32.mrb[0].mxu0
    %v1160 = vadd.f32 %v1088, %v1159
    %v1161 = vpop.f32.mrb[0].mxu0
    %1162 = vdwg.mxu0
    %v1163 = vmax.f32 %v1160, 0.0
    %v1164 = vld [vmem:[#allocation12 + $0x200] sm:$0xff]
    %v1165 = vld [vmem:[#allocation12 + $0x208] sm:$0xff]
    %v1166 = vld [vmem:[#allocation12 + $0x210] sm:$0xff]
    %v1167 = vld [vmem:[#allocation12 + $0x218] sm:$0xff]
    %v1168 = vld [vmem:[#allocation12 + $0x220] sm:$0xf]
    %v1169 = vld [vmem:[#allocation12 + $0x228] sm:$0x1]
    %v1170 = vlaneseq
    %v1171 = vshrl.u32 %v1170, 7
    %v1172 = vsub.s32 0, %v1171
    %v1173 = vrot.slane %v1169, %v1172
    %vm1174 = vcmask 293888
    %v1176 = vsel %vm1174, %v1163, 0
    %v1179 = vsel %vm487, %v1168, 0
    %1181 = vmatprep.subr.mxu0 0.0
    %1182 = vmatpush1.msra.mxu0 %v1164
    %1183 = vmatprep.subr.mxu0 0.0
    %1184 = vmatpush1.msra.mxu0 %v1165
    %1185 = vmatprep.subr.mxu0 0.0
    %1186 = vmatpush1.msra.mxu0 %v1166
    %1187 = vmatprep.subr.mxu0 0.0
    %1188 = vmatpush1.msra.mxu0 %v1167
    %1189 = vmatprep.subr.mxu0 0.0
    %1190 = vmatpush1.msra.mxu0 %v1179
    %1191 = vmatprep.subr.mxu0 0.0
    %1192 = vmatpush1.msra.mxu0 0.0
    %1193 = vmatprep.subr.mxu0 0.0
    %1194 = vmatpush1.msra.mxu0 0.0
    %1195 = vmatprep.subr.mxu0 0.0
    %1196 = vmatpush1.msra.mxu0 0.0
    %1197 = vmatprep.subr.mxu0 0.0
    %1198 = vmatpush1.msra.mxu0 0.0
    %1199 = vmatprep.subr.mxu0 0.0
    %1200 = vmatpush1.msra.mxu0 0.0
    %1201 = vmatprep.subr.mxu0 0.0
    %1202 = vmatpush1.msra.mxu0 0.0
    %1203 = vmatprep.subr.mxu0 0.0
    %1204 = vmatpush1.msra.mxu0 0.0
    %1205 = vmatprep.subr.mxu0 0.0
    %1206 = vmatpush1.msra.mxu0 0.0
    %1207 = vmatprep.subr.mxu0 0.0
    %1208 = vmatpush1.msra.mxu0 0.0
    %1209 = vmatprep.subr.mxu0 0.0
    %1210 = vmatpush1.msra.mxu0 0.0
    %1211 = vmatprep.subr.mxu0 0.0
    %1212 = vmatpush1.msra.mxu0 0.0
    %1213 = vmatprep.subr.mxu0 0.0
    %1214 = vmatpush1.msra.mxu0 0.0
    %1215 = vmatprep.subr.mxu0 0.0
    %1216 = vmatpush1.msra.mxu0 0.0
    %1217 = vmatprep.subr.mxu0 0.0
    %1218 = vmatpush1.msra.mxu0 0.0
    %1219 = vmatprep.subr.mxu0 0.0
    %1220 = vmatpush1.msra.mxu0 0.0
    %1221 = vmatprep.subr.mxu0 0.0
    %1222 = vmatpush1.msra.mxu0 0.0
    %1223 = vmatprep.subr.mxu0 0.0
    %1224 = vmatpush1.msra.mxu0 0.0
    %1225 = vmatprep.subr.mxu0 0.0
    %1226 = vmatpush1.msra.mxu0 0.0
    %1227 = vmatprep.subr.mxu0 0.0
    %1228 = vmatpush1.msra.mxu0 0.0
    %1229 = vmatprep.subr.mxu0 0.0
    %1230 = vmatpush1.msra.mxu0 0.0
    %1231 = vmatprep.subr.mxu0 0.0
    %1232 = vmatpush1.msra.mxu0 0.0
    %1233 = vmatprep.subr.mxu0 0.0
    %1234 = vmatpush1.msra.mxu0 0.0
    %1235 = vmatprep.subr.mxu0 0.0
    %1236 = vmatpush1.msra.mxu0 0.0
    %1237 = vmatprep.subr.mxu0 0.0
    %1238 = vmatpush1.msra.mxu0 0.0
    %1239 = vmatprep.subr.mxu0 0.0
    %1240 = vmatpush1.msra.mxu0 0.0
    %1241 = vmatprep.subr.mxu0 0.0
    %1242 = vmatpush1.msra.mxu0 0.0
    %1243 = vmatprep.subr.mxu0 0.0
    %1244 = vmatpush1.msra.mxu0 0.0
    %1245 = vmatprep.mubr.f32.mxu0 0.0
    %1246 = vmatmul.mubr.f32.gmra.mrb[0].mxu0 %v1176
    %v1247 = vpop.f32.mrb[0].mxu0
    %v1248 = vadd.f32 %v1173, %v1247
    %v1249 = vpop.f32.mrb[0].mxu0
    %1250 = vdwg.mxu0
    %v1251 = vmax.f32 %v1248, 0.0
    %v1252 = vld [vmem:[#allocation12 + $0x230] sm:$0xff]
    %v1253 = vld [vmem:[#allocation12 + $0x238] sm:$0xff]
    %v1254 = vld [vmem:[#allocation12 + $0x240] sm:$0xff]
    %v1255 = vld [vmem:[#allocation12 + $0x248] sm:$0x3f]
    %v1256 = vld [vmem:[#allocation12 + $0x250] sm:$0x1]
    %v1257 = vlaneseq
    %v1258 = vshrl.u32 %v1257, 7
    %v1259 = vsub.s32 0, %v1258
    %v1260 = vrot.slane %v1256, %v1259
    %vm1261 = vcmask 244736
    %v1263 = vsel %vm1261, %v1251, 0
    %vm1265 = vcmask 1045504
    %v1267 = vsel %vm1265, %v1255, 0
    %1269 = vmatprep.subr.mxu0 0.0
    %1270 = vmatpush1.msra.mxu0 %v1252
    %1271 = vmatprep.subr.mxu0 0.0
    %1272 = vmatpush1.msra.mxu0 %v1253
    %1273 = vmatprep.subr.mxu0 0.0
    %1274 = vmatpush1.msra.mxu0 %v1254
    %1275 = vmatprep.subr.mxu0 0.0
    %1276 = vmatpush1.msra.mxu0 %v1267
    %1277 = vmatprep.subr.mxu0 0.0
    %1278 = vmatpush1.msra.mxu0 0.0
    %1279 = vmatprep.subr.mxu0 0.0
    %1280 = vmatpush1.msra.mxu0 0.0
    %1281 = vmatprep.subr.mxu0 0.0
    %1282 = vmatpush1.msra.mxu0 0.0
    %1283 = vmatprep.subr.mxu0 0.0
    %1284 = vmatpush1.msra.mxu0 0.0
    %1285 = vmatprep.subr.mxu0 0.0
    %1286 = vmatpush1.msra.mxu0 0.0
    %1287 = vmatprep.subr.mxu0 0.0
    %1288 = vmatpush1.msra.mxu0 0.0
    %1289 = vmatprep.subr.mxu0 0.0
    %1290 = vmatpush1.msra.mxu0 0.0
    %1291 = vmatprep.subr.mxu0 0.0
    %1292 = vmatpush1.msra.mxu0 0.0
    %1293 = vmatprep.subr.mxu0 0.0
    %1294 = vmatpush1.msra.mxu0 0.0
    %1295 = vmatprep.subr.mxu0 0.0
    %1296 = vmatpush1.msra.mxu0 0.0
    %1297 = vmatprep.subr.mxu0 0.0
    %1298 = vmatpush1.msra.mxu0 0.0
    %1299 = vmatprep.subr.mxu0 0.0
    %1300 = vmatpush1.msra.mxu0 0.0
    %1301 = vmatprep.subr.mxu0 0.0
    %1302 = vmatpush1.msra.mxu0 0.0
    %1303 = vmatprep.subr.mxu0 0.0
    %1304 = vmatpush1.msra.mxu0 0.0
    %1305 = vmatprep.subr.mxu0 0.0
    %1306 = vmatpush1.msra.mxu0 0.0
    %1307 = vmatprep.subr.mxu0 0.0
    %1308 = vmatpush1.msra.mxu0 0.0
    %1309 = vmatprep.subr.mxu0 0.0
    %1310 = vmatpush1.msra.mxu0 0.0
    %1311 = vmatprep.subr.mxu0 0.0
    %1312 = vmatpush1.msra.mxu0 0.0
    %1313 = vmatprep.subr.mxu0 0.0
    %1314 = vmatpush1.msra.mxu0 0.0
    %1315 = vmatprep.subr.mxu0 0.0
    %1316 = vmatpush1.msra.mxu0 0.0
    %1317 = vmatprep.subr.mxu0 0.0
    %1318 = vmatpush1.msra.mxu0 0.0
    %1319 = vmatprep.subr.mxu0 0.0
    %1320 = vmatpush1.msra.mxu0 0.0
    %1321 = vmatprep.subr.mxu0 0.0
    %1322 = vmatpush1.msra.mxu0 0.0
    %1323 = vmatprep.subr.mxu0 0.0
    %1324 = vmatpush1.msra.mxu0 0.0
    %1325 = vmatprep.subr.mxu0 0.0
    %1326 = vmatpush1.msra.mxu0 0.0
    %1327 = vmatprep.subr.mxu0 0.0
    %1328 = vmatpush1.msra.mxu0 0.0
    %1329 = vmatprep.subr.mxu0 0.0
    %1330 = vmatpush1.msra.mxu0 0.0
    %1331 = vmatprep.subr.mxu0 0.0
    %1332 = vmatpush1.msra.mxu0 0.0
    %1333 = vmatprep.mubr.f32.mxu0 0.0
    %1334 = vmatmul.mubr.f32.gmra.mrb[0].mxu0 %v1263
    %v1335 = vpop.f32.mrb[0].mxu0
    %v1336 = vadd.f32 %v1260, %v1335
    %v1337 = vpop.f32.mrb[0].mxu0
    %1338 = vdwg.mxu0
    %vm1339 = vcmask 74752
    %1340 = vst.msk [vmem:[#allocation14] sm:$0x3] %vm1339, %v1336
    // Predicated region
    $region18: #{net5_forward.1} parent=1 // pred_check
      _
    $region19: #{net5_forward.1} parent=1 // pred_check_branch
      %1342 = sbr.rel (0) target = $region21
    $region20: #{net5_forward.1} parent=1 // pred_region
      %s1344 = ssub.s32 32, 32
      %1345 = vsyncadd [#allocation11], %s1344
      %s1347 = sshll.u32 [#allocation14], 4
      %s1348 = int_to_ptr.vmem [resolvable:$true] %s1347
      %1350 = dma.vmem_to_hbm [thread:$0]  %s1348, 32, %s2, [#allocation11]
    $region21: #{net5_forward.1} parent=1 // pred_fallthru
      _
    // Predicated region
    $region22: #{net5_forward.1} parent=1 // pred_check
      _
    $region23: #{net5_forward.1} parent=1 // pred_check_branch
      %1352 = sbr.rel (0) target = $region25
    $region24: #{net5_forward.1} parent=1 // pred_region
      %1353 = dma.done [#allocation11], 32
    $region25: #{net5_forward.1} parent=1 // pred_fallthru
      _
    %1354 = vsyncpa [#allocation10], 1
    %1355 = vsyncpa [#allocation13], 1
    %1356 = vsyncpa [#allocation11], 1

</llo_original>
